<compile_context>
chip_gen: v6e
topology: v6e:2x2x1
jax: 0.10.0
libtpu: 0.0.40
codegen_flags: <defaults>
</compile_context>

<pallas_src>
import functools

import jax
import jax.numpy as jnp
import numpy as np
from jax.experimental import pallas as pl
from jax.experimental.pallas import tpu as pltpu

_EPS = 1e-5


def _cdiv(a, b):
    return -(-a // b)


def _round_up(x, m):
    return _cdiv(x, m) * m


# ---------------------------------------------------------------------------
# Kernel: 3x3 conv (taps expanded in-kernel) + BN + [shortcut|residual] + ReLU
# ---------------------------------------------------------------------------
def _conv3x3_kernel(*refs, stride, Mq, Ws, apply_relu, has_residual,
                    has_shortcut):
    it = iter(refs)
    x_ref = next(it)        # (S2, Lp, Cin)     bf16  per-image phase rows
    w_ref = next(it)        # (9, Cin, Coutp)   bf16  tap weights (resident)
    scale_ref = next(it)    # (1, Coutp)        f32   BN scale (main conv)
    shift_ref = next(it)    # (1, Coutp)        f32   BN shift (+ shortcut's)
    res_ref = next(it) if has_residual else None      # (Mq, Coutp) f32
    if has_shortcut:
        xs_ref = next(it)        # (Mq, Cs)     bf16  strided input rows
        wsc_ref = next(it)       # (Cs, Coutp)  bf16  1x1 shortcut weight
        sc_scale_ref = next(it)  # (1, Coutp)   f32   shortcut BN scale
    o_ref = next(it)        # (Mq, Coutp)

    s = stride
    acc = None
    for dh in range(3):
        for dw in range(3):
            p = (dh % s) * s + (dw % s)           # spatial phase index
            off = (dh // s) * Ws + (dw // s)      # static row offset
            lhs = x_ref[p, pl.ds(off, Mq), :]
            d = jnp.dot(lhs, w_ref[dh * 3 + dw],
                        preferred_element_type=jnp.float32)
            acc = d if acc is None else acc + d

    out = acc * scale_ref[...] + shift_ref[...]
    if has_shortcut:
        sc = jnp.dot(xs_ref[...], wsc_ref[...],
                     preferred_element_type=jnp.float32)
        out = out + sc * sc_scale_ref[...]
    if has_residual:
        out = out + res_ref[...].astype(jnp.float32)
    if apply_relu:
        out = jnp.maximum(out, 0.0)
    o_ref[...] = out.astype(o_ref.dtype)


# ---------------------------------------------------------------------------
# Wrapper glue: spatial pad + phase split (no 9x im2col!)
# ---------------------------------------------------------------------------
def _phase_split(x_bf, stride):
    """Pad + phase-split a NHWC image so every 3x3 tap is a contiguous row
    window of a flat (row-major) per-image array.

    Returns phases (N, stride*stride, Hs*Ws, C) and (Ho, Wo, Ws).  Rows past
    the valid image (and the extra right columns) only feed junk output
    columns j >= Wo which are sliced off afterwards."""
    N, H, W, C = x_bf.shape
    s = stride
    Ho = (H - 1) // s + 1
    Wo = (W - 1) // s + 1
    # conv padding (1,1) + s extra zero rows at the bottom keep all tap
    # windows of length Ho*Ws in-bounds.
    xp = jnp.pad(x_bf, ((0, 0), (1, 1 + s), (1, 1), (0, 0)))
    Hp, Wp = H + 2 + s, W + 2
    Hp2, Wp2 = _round_up(Hp, s), _round_up(Wp, s)
    if (Hp2, Wp2) != (Hp, Wp):
        xp = jnp.pad(xp, ((0, 0), (0, Hp2 - Hp), (0, Wp2 - Wp), (0, 0)))
    Hs, Ws = Hp2 // s, Wp2 // s
    if s == 1:
        phases = xp.reshape(N, 1, Hs * Ws, C)           # free reshape
    else:
        phases = jnp.stack(
            [xp[:, ph::s, pw::s, :].reshape(N, Hs * Ws, C)
             for ph in range(s) for pw in range(s)], axis=1)
    return phases, (Ho, Wo, Ws)


def conv3x3_bn_act(x_img, w_oihw, bn_affine, *, stride=1, apply_relu=True,
                   out_dtype=jnp.bfloat16, residual_img=None, shortcut=None):
    """Fused 3x3 conv (pad 1) + BN + optional residual / 1x1 shortcut + ReLU.

    x_img        : (N, H, W, Cin) NHWC activation.
    w_oihw       : (Cout, Cin, 3, 3) conv weight.
    bn_affine    : (scale, shift) -- eval-mode BN as a per-channel affine.
    residual_img : optional (N, Ho, Wo, C<=Cout) f32, added before ReLU.
    shortcut     : optional (xs_img, w_1x1, sc_scale, sc_shift): fused strided
                   1x1 conv + BN added before ReLU
                   (xs_img: (N, Ho, Wo, Cs), w_1x1: (Cout, Cs)).
    Returns (N, Ho, Wo, Cout) in out_dtype.
    """
    N, H, W, Cin = x_img.shape
    Cout = w_oihw.shape[0]
    Coutp = _round_up(Cout, 128)                 # lane-dense output block

    phases, (Ho, Wo, Ws) = _phase_split(x_img.astype(jnp.bfloat16), stride)
    S2, Lp = phases.shape[1], phases.shape[2]
    Mq = Ho * Ws                                 # output rows on padded grid

    # Tap-major weights (dh, dw, Cin, Cout), lane padded, bf16 and *unscaled*
    # (the BN scale is applied in the f32 epilogue for accuracy).
    w_taps = jnp.transpose(w_oihw, (2, 3, 1, 0)).reshape(9, Cin, Cout)
    w_taps = jnp.pad(w_taps, ((0, 0), (0, 0), (0, Coutp - Cout)))
    w_taps = w_taps.astype(jnp.bfloat16)

    scale, shift = bn_affine
    scale = scale.astype(jnp.float32)
    shift = shift.astype(jnp.float32)
    if shortcut is not None:
        xs_img, w_1x1, sc_scale, sc_shift = shortcut
        shift = shift + sc_shift.astype(jnp.float32)   # fold shortcut BN shift
    scale2 = jnp.pad(scale, (0, Coutp - Cout)).reshape(1, Coutp)
    shift2 = jnp.pad(shift, (0, Coutp - Cout)).reshape(1, Coutp)

    in_specs = [
        pl.BlockSpec((None, S2, Lp, Cin), lambda n: (n, 0, 0, 0)),
        pl.BlockSpec((9, Cin, Coutp), lambda n: (0, 0, 0)),   # resident
        pl.BlockSpec((1, Coutp), lambda n: (0, 0)),           # resident
        pl.BlockSpec((1, Coutp), lambda n: (0, 0)),           # resident
    ]
    args = [phases, w_taps, scale2, shift2]

    has_res = residual_img is not None
    has_sc = shortcut is not None
    if has_res:
        r = residual_img.astype(jnp.float32)
        r = jnp.pad(r, ((0, 0), (0, 0), (0, Ws - Wo),
                        (0, Coutp - r.shape[-1])))
        args.append(r.reshape(N, Mq, Coutp))
        in_specs.append(pl.BlockSpec((None, Mq, Coutp), lambda n: (n, 0, 0)))
    if has_sc:
        Cs = xs_img.shape[-1]
        xs = jnp.pad(xs_img.astype(jnp.bfloat16),
                     ((0, 0), (0, 0), (0, Ws - Wo), (0, 0)))
        wsc = jnp.pad(jnp.transpose(w_1x1, (1, 0)),
                      ((0, 0), (0, Coutp - Cout))).astype(jnp.bfloat16)
        scs = jnp.pad(sc_scale.astype(jnp.float32),
                      (0, Coutp - Cout)).reshape(1, Coutp)
        args += [xs.reshape(N, Mq, Cs), wsc, scs]
        in_specs += [pl.BlockSpec((None, Mq, Cs), lambda n: (n, 0, 0)),
                     pl.BlockSpec((Cs, Coutp), lambda n: (0, 0)),
                     pl.BlockSpec((1, Coutp), lambda n: (0, 0))]

    kernel = functools.partial(
        _conv3x3_kernel, stride=stride, Mq=Mq, Ws=Ws, apply_relu=apply_relu,
        has_residual=has_res, has_shortcut=has_sc)

    out = pl.pallas_call(
        kernel,
        out_shape=jax.ShapeDtypeStruct((N, Mq, Coutp), out_dtype),
        grid=(N,),
        in_specs=in_specs,
        out_specs=pl.BlockSpec((None, Mq, Coutp), lambda n: (n, 0, 0)),
        compiler_params=pltpu.CompilerParams(
            dimension_semantics=("parallel",),
            vmem_limit_bytes=32 * 1024 * 1024),
    )(*args)

    return out.reshape(N, Ho, Ws, Coutp)[:, :, :Wo, :Cout]


# ---------------------------------------------------------------------------
# BasicBlock forward (eval-mode BatchNorm, matching PyTorch inference math)
# ---------------------------------------------------------------------------
def _bn_affine(bn, eps=_EPS):
    gamma, beta, mean, var = bn
    scale = gamma / jnp.sqrt(var + eps)
    return scale, beta - mean * scale


def basic_block_forward_nhwc(x_nhwc, params, stride):
    """NHWC in / NHWC out -- keep NHWC end-to-end when chaining blocks."""
    in_planes = x_nhwc.shape[-1]
    planes = params["w1"].shape[0]

    # conv1 (3x3, stride) + bn1 + relu  -> bf16 intermediate
    out1 = conv3x3_bn_act(x_nhwc, params["w1"], _bn_affine(params["bn1"]),
                          stride=stride, apply_relu=True,
                          out_dtype=jnp.bfloat16)

    # conv2 (3x3, stride 1) + bn2 + residual/shortcut + relu, all in one kernel
    if stride != 1 or in_planes != planes:
        ssc, bsc = _bn_affine(params["bnsc"])
        xs = x_nhwc[:, ::stride, ::stride, :]            # 1x1 strided sampling
        shortcut = (xs, params["wsc"][:, :, 0, 0], ssc, bsc)
        out = conv3x3_bn_act(out1, params["w2"], _bn_affine(params["bn2"]),
                             stride=1, apply_relu=True,
                             out_dtype=jnp.float32, shortcut=shortcut)
    else:
        out = conv3x3_bn_act(out1, params["w2"], _bn_affine(params["bn2"]),
                             stride=1, apply_relu=True,
                             out_dtype=jnp.float32,
                             residual_img=x_nhwc.astype(jnp.float32))
    return out


def basic_block_forward(x_nchw, params, stride):
    x = jnp.transpose(x_nchw, (0, 2, 3, 1))              # NCHW -> NHWC
    out = basic_block_forward_nhwc(x, params, stride)
    return jnp.transpose(out, (0, 3, 1, 2))              # NHWC -> NCHW


# ---------------------------------------------------------------------------
# Pure-JAX references (lax.conv, f32) for verification
# ---------------------------------------------------------------------------
def _ref_conv_bn_relu(x_nhwc, w, bn, stride, relu=True):
    xc = jnp.transpose(x_nhwc, (0, 3, 1, 2))
    y = jax.lax.conv_general_dilated(
        xc, w, (stride, stride), ((1, 1), (1, 1)),
        dimension_numbers=("NCHW", "OIHW", "NCHW"))
    g, b, m, v = bn
    y = ((y - m[None, :, None, None]) /
         jnp.sqrt(v[None, :, None, None] + _EPS) *
         g[None, :, None, None] + b[None, :, None, None])
    if relu:
        y = jnp.maximum(y, 0.0)
    return jnp.transpose(y, (0, 2, 3, 1))


def _ref_forward(x, params, stride):
    def conv(x, w, s, pad):
        return jax.lax.conv_general_dilated(
            x, w, (s, s), ((pad, pad), (pad, pad)),
            dimension_numbers=("NCHW", "OIHW", "NCHW"))

    def bn(x, p):
        g, b, m, v = p
        return ((x - m[None, :, None, None]) /
                jnp.sqrt(v[None, :, None, None] + _EPS) *
                g[None, :, None, None] + b[None, :, None, None])

    out = jax.nn.relu(bn(conv(x, params["w1"], stride, 1), params["bn1"]))
    out = bn(conv(out, params["w2"], 1, 1), params["bn2"])
    sc = x
    if "wsc" in params:
        sc = bn(conv(x, params["wsc"], stride, 0), params["bnsc"])
    return jax.nn.relu(out + sc)


# ---------------------------------------------------------------------------
def _rand_bn(key, c):
    k0, k1, k2, k3 = jax.random.split(key, 4)
    return (jax.random.uniform(k0, (c,), jnp.float32, 0.8, 1.2),   # gamma
            0.1 * jax.random.normal(k1, (c,), jnp.float32),        # beta
            0.1 * jax.random.normal(k2, (c,), jnp.float32),        # mean
            jax.random.uniform(k3, (c,), jnp.float32, 0.8, 1.2))   # var


def _make_params(key, in_planes, planes, stride):
    ks = jax.random.split(key, 6)
    params = {
        "w1": 0.2 * jax.random.normal(ks[0], (planes, in_planes, 3, 3),
                                      jnp.float32),
        "bn1": _rand_bn(ks[1], planes),
        "w2": 0.2 * jax.random.normal(ks[2], (planes, planes, 3, 3),
                                      jnp.float32),
        "bn2": _rand_bn(ks[3], planes),
    }
    if stride != 1 or in_planes != planes:
        params["wsc"] = 0.2 * jax.random.normal(
            ks[4], (planes, in_planes, 1, 1), jnp.float32)
        params["bnsc"] = _rand_bn(ks[5], planes)
    return params


if __name__ == "__main__":
    key = jax.random.PRNGKey(0)
    kt, kx1, kp1, kx2, kp2 = jax.random.split(key, 5)

    # --- unit test of the fused conv kernel: stride 1 and 2, lane padding ---
    for s_u in (1, 2):
        kk = jax.random.split(jax.random.fold_in(kt, s_u), 3)
        Nu, Hu, Ci_u, Co_u = 2, 12, 24, 40
        xu = jax.random.normal(kk[0], (Nu, Hu, Hu, Ci_u), jnp.float32)
        wu = 0.1 * jax.random.normal(kk[1], (Co_u, Ci_u, 3, 3), jnp.float32)
        bnu = _rand_bn(kk[2], Co_u)
        got = jax.block_until_ready(
            conv3x3_bn_act(xu, wu, _bn_affine(bnu), stride=s_u,
                           apply_relu=True, out_dtype=jnp.float32))
        ref_u = _ref_conv_bn_relu(xu, wu, bnu, s_u)
        np.testing.assert_allclose(np.asarray(got), np.asarray(ref_u),
                                   rtol=5e-2, atol=1e-1)

    # --- BasicBlock, downsampling projection shortcut (stride=2, 4->8) ------
    N, in_planes, planes, stride, H = 2, 4, 8, 2, 16
    x = jax.random.normal(kx1, (N, in_planes, H, H), jnp.float32)
    params = _make_params(kp1, in_planes, planes, stride)
    out = jax.block_until_ready(basic_block_forward(x, params, stride))
    ref = jax.block_until_ready(_ref_forward(x, params, stride))
    # bf16 MXU operands (f32 accumulation / epilogue) -> loosened tolerance.
    np.testing.assert_allclose(np.asarray(out), np.asarray(ref),
                               rtol=5e-2, atol=1e-1)

    # --- BasicBlock, identity shortcut (stride=1, 8->8 planes) --------------
    N2, planes2, H2 = 2, 8, 8
    x2 = jax.random.normal(kx2, (N2, planes2, H2, H2), jnp.float32)
    params2 = _make_params(kp2, planes2, planes2, 1)
    out2 = jax.block_until_ready(basic_block_forward(x2, params2, 1))
    ref2 = jax.block_until_ready(_ref_forward(x2, params2, 1))
    np.testing.assert_allclose(np.asarray(out2), np.asarray(ref2),
                               rtol=5e-2, atol=1e-1)

    print("KERNEL_OK")
</pallas_src>

<mosaic_0001>
module attributes {stable_mosaic.version = 11 : i64} {
  func.func @_conv3x3_kernel(%arg0: i32, %arg1: memref<1x1x210x24xbf16, #tpu.memory_space<vmem>>, %arg2: memref<9x24x128xbf16, #tpu.memory_space<vmem>>, %arg3: memref<1x128xf32, #tpu.memory_space<vmem>>, %arg4: memref<1x128xf32, #tpu.memory_space<vmem>>, %arg5: memref<1x168x128xf32, #tpu.memory_space<vmem>>) attributes {dimension_semantics = [#tpu.dimension_semantics<parallel>], iteration_bounds = array<i64: 2>, scalar_prefetch = 0 : i64, scratch_operands = 0 : i64, tpu.core_type = #tpu.core_type<tc>, window_params = [{transform_indices = @transform_0, window_bounds = array<i64: 1, 1, 210, 24>}, {pipeline_mode = #tpu.pipeline_mode<synchronous>, transform_indices = @transform_1, window_bounds = array<i64: 9, 24, 128>}, {pipeline_mode = #tpu.pipeline_mode<synchronous>, transform_indices = @transform_2, window_bounds = array<i64: 1, 128>}, {pipeline_mode = #tpu.pipeline_mode<synchronous>, transform_indices = @transform_3, window_bounds = array<i64: 1, 128>}, {transform_indices = @transform_4, window_bounds = array<i64: 1, 168, 128>}]} {
    %c0 = arith.constant 0 : index
    %c0_0 = arith.constant 0 : index
    %c0_1 = arith.constant 0 : index
    %c0_2 = arith.constant 0 : index
    %0 = vector.load %arg1[%c0, %c0_0, %c0_1, %c0_2] : memref<1x1x210x24xbf16, #tpu.memory_space<vmem>>, vector<1x1x168x24xbf16>
    %1 = vector.shape_cast %0 : vector<1x1x168x24xbf16> to vector<168x24xbf16>
    %c0_3 = arith.constant 0 : index
    %c0_4 = arith.constant 0 : index
    %c0_5 = arith.constant 0 : index
    %2 = vector.load %arg2[%c0_3, %c0_4, %c0_5] : memref<9x24x128xbf16, #tpu.memory_space<vmem>>, vector<1x24x128xbf16>
    %3 = vector.shape_cast %2 : vector<1x24x128xbf16> to vector<24x128xbf16>
    %cst = arith.constant dense<0.000000e+00> : vector<168x128xf32>
    %4 = tpu.matmul %1, %3, %cst {dimension_numbers = #tpu.dot_dimension_numbers<[1], [0], [0], [1], [0, 0, 1, 1], [], []>} : vector<168x24xbf16>, vector<24x128xbf16>, vector<168x128xf32> -> vector<168x128xf32>
    %c0_6 = arith.constant 0 : index
    %c0_7 = arith.constant 0 : index
    %c1 = arith.constant 1 : index
    %c0_8 = arith.constant 0 : index
    %5 = vector.load %arg1[%c0_6, %c0_7, %c1, %c0_8] : memref<1x1x210x24xbf16, #tpu.memory_space<vmem>>, vector<1x1x168x24xbf16>
    %6 = vector.shape_cast %5 : vector<1x1x168x24xbf16> to vector<168x24xbf16>
    %c1_9 = arith.constant 1 : index
    %c0_10 = arith.constant 0 : index
    %c0_11 = arith.constant 0 : index
    %7 = vector.load %arg2[%c1_9, %c0_10, %c0_11] : memref<9x24x128xbf16, #tpu.memory_space<vmem>>, vector<1x24x128xbf16>
    %8 = vector.shape_cast %7 : vector<1x24x128xbf16> to vector<24x128xbf16>
    %cst_12 = arith.constant dense<0.000000e+00> : vector<168x128xf32>
    %9 = tpu.matmul %6, %8, %cst_12 {dimension_numbers = #tpu.dot_dimension_numbers<[1], [0], [0], [1], [0, 0, 1, 1], [], []>} : vector<168x24xbf16>, vector<24x128xbf16>, vector<168x128xf32> -> vector<168x128xf32>
    %10 = arith.addf %4, %9 : vector<168x128xf32>
    %c0_13 = arith.constant 0 : index
    %c0_14 = arith.constant 0 : index
    %c2 = arith.constant 2 : index
    %c0_15 = arith.constant 0 : index
    %11 = vector.load %arg1[%c0_13, %c0_14, %c2, %c0_15] : memref<1x1x210x24xbf16, #tpu.memory_space<vmem>>, vector<1x1x168x24xbf16>
    %12 = vector.shape_cast %11 : vector<1x1x168x24xbf16> to vector<168x24xbf16>
    %c2_16 = arith.constant 2 : index
    %c0_17 = arith.constant 0 : index
    %c0_18 = arith.constant 0 : index
    %13 = vector.load %arg2[%c2_16, %c0_17, %c0_18] : memref<9x24x128xbf16, #tpu.memory_space<vmem>>, vector<1x24x128xbf16>
    %14 = vector.shape_cast %13 : vector<1x24x128xbf16> to vector<24x128xbf16>
    %cst_19 = arith.constant dense<0.000000e+00> : vector<168x128xf32>
    %15 = tpu.matmul %12, %14, %cst_19 {dimension_numbers = #tpu.dot_dimension_numbers<[1], [0], [0], [1], [0, 0, 1, 1], [], []>} : vector<168x24xbf16>, vector<24x128xbf16>, vector<168x128xf32> -> vector<168x128xf32>
    %16 = arith.addf %10, %15 : vector<168x128xf32>
    %c0_20 = arith.constant 0 : index
    %c0_21 = arith.constant 0 : index
    %c14 = arith.constant 14 : index
    %c0_22 = arith.constant 0 : index
    %17 = vector.load %arg1[%c0_20, %c0_21, %c14, %c0_22] : memref<1x1x210x24xbf16, #tpu.memory_space<vmem>>, vector<1x1x168x24xbf16>
    %18 = vector.shape_cast %17 : vector<1x1x168x24xbf16> to vector<168x24xbf16>
    %c3 = arith.constant 3 : index
    %c0_23 = arith.constant 0 : index
    %c0_24 = arith.constant 0 : index
    %19 = vector.load %arg2[%c3, %c0_23, %c0_24] : memref<9x24x128xbf16, #tpu.memory_space<vmem>>, vector<1x24x128xbf16>
    %20 = vector.shape_cast %19 : vector<1x24x128xbf16> to vector<24x128xbf16>
    %cst_25 = arith.constant dense<0.000000e+00> : vector<168x128xf32>
    %21 = tpu.matmul %18, %20, %cst_25 {dimension_numbers = #tpu.dot_dimension_numbers<[1], [0], [0], [1], [0, 0, 1, 1], [], []>} : vector<168x24xbf16>, vector<24x128xbf16>, vector<168x128xf32> -> vector<168x128xf32>
    %22 = arith.addf %16, %21 : vector<168x128xf32>
    %c0_26 = arith.constant 0 : index
    %c0_27 = arith.constant 0 : index
    %c15 = arith.constant 15 : index
    %c0_28 = arith.constant 0 : index
    %23 = vector.load %arg1[%c0_26, %c0_27, %c15, %c0_28] : memref<1x1x210x24xbf16, #tpu.memory_space<vmem>>, vector<1x1x168x24xbf16>
    %24 = vector.shape_cast %23 : vector<1x1x168x24xbf16> to vector<168x24xbf16>
    %c4 = arith.constant 4 : index
    %c0_29 = arith.constant 0 : index
    %c0_30 = arith.constant 0 : index
    %25 = vector.load %arg2[%c4, %c0_29, %c0_30] : memref<9x24x128xbf16, #tpu.memory_space<vmem>>, vector<1x24x128xbf16>
    %26 = vector.shape_cast %25 : vector<1x24x128xbf16> to vector<24x128xbf16>
    %cst_31 = arith.constant dense<0.000000e+00> : vector<168x128xf32>
    %27 = tpu.matmul %24, %26, %cst_31 {dimension_numbers = #tpu.dot_dimension_numbers<[1], [0], [0], [1], [0, 0, 1, 1], [], []>} : vector<168x24xbf16>, vector<24x128xbf16>, vector<168x128xf32> -> vector<168x128xf32>
    %28 = arith.addf %22, %27 : vector<168x128xf32>
    %c0_32 = arith.constant 0 : index
    %c0_33 = arith.constant 0 : index
    %c16 = arith.constant 16 : index
    %c0_34 = arith.constant 0 : index
    %29 = vector.load %arg1[%c0_32, %c0_33, %c16, %c0_34] : memref<1x1x210x24xbf16, #tpu.memory_space<vmem>>, vector<1x1x168x24xbf16>
    %30 = vector.shape_cast %29 : vector<1x1x168x24xbf16> to vector<168x24xbf16>
    %c5 = arith.constant 5 : index
    %c0_35 = arith.constant 0 : index
    %c0_36 = arith.constant 0 : index
    %31 = vector.load %arg2[%c5, %c0_35, %c0_36] : memref<9x24x128xbf16, #tpu.memory_space<vmem>>, vector<1x24x128xbf16>
    %32 = vector.shape_cast %31 : vector<1x24x128xbf16> to vector<24x128xbf16>
    %cst_37 = arith.constant dense<0.000000e+00> : vector<168x128xf32>
    %33 = tpu.matmul %30, %32, %cst_37 {dimension_numbers = #tpu.dot_dimension_numbers<[1], [0], [0], [1], [0, 0, 1, 1], [], []>} : vector<168x24xbf16>, vector<24x128xbf16>, vector<168x128xf32> -> vector<168x128xf32>
    %34 = arith.addf %28, %33 : vector<168x128xf32>
    %c0_38 = arith.constant 0 : index
    %c0_39 = arith.constant 0 : index
    %c28 = arith.constant 28 : index
    %c0_40 = arith.constant 0 : index
    %35 = vector.load %arg1[%c0_38, %c0_39, %c28, %c0_40] : memref<1x1x210x24xbf16, #tpu.memory_space<vmem>>, vector<1x1x168x24xbf16>
    %36 = vector.shape_cast %35 : vector<1x1x168x24xbf16> to vector<168x24xbf16>
    %c6 = arith.constant 6 : index
    %c0_41 = arith.constant 0 : index
    %c0_42 = arith.constant 0 : index
    %37 = vector.load %arg2[%c6, %c0_41, %c0_42] : memref<9x24x128xbf16, #tpu.memory_space<vmem>>, vector<1x24x128xbf16>
    %38 = vector.shape_cast %37 : vector<1x24x128xbf16> to vector<24x128xbf16>
    %cst_43 = arith.constant dense<0.000000e+00> : vector<168x128xf32>
    %39 = tpu.matmul %36, %38, %cst_43 {dimension_numbers = #tpu.dot_dimension_numbers<[1], [0], [0], [1], [0, 0, 1, 1], [], []>} : vector<168x24xbf16>, vector<24x128xbf16>, vector<168x128xf32> -> vector<168x128xf32>
    %40 = arith.addf %34, %39 : vector<168x128xf32>
    %c0_44 = arith.constant 0 : index
    %c0_45 = arith.constant 0 : index
    %c29 = arith.constant 29 : index
    %c0_46 = arith.constant 0 : index
    %41 = vector.load %arg1[%c0_44, %c0_45, %c29, %c0_46] : memref<1x1x210x24xbf16, #tpu.memory_space<vmem>>, vector<1x1x168x24xbf16>
    %42 = vector.shape_cast %41 : vector<1x1x168x24xbf16> to vector<168x24xbf16>
    %c7 = arith.constant 7 : index
    %c0_47 = arith.constant 0 : index
    %c0_48 = arith.constant 0 : index
    %43 = vector.load %arg2[%c7, %c0_47, %c0_48] : memref<9x24x128xbf16, #tpu.memory_space<vmem>>, vector<1x24x128xbf16>
    %44 = vector.shape_cast %43 : vector<1x24x128xbf16> to vector<24x128xbf16>
    %cst_49 = arith.constant dense<0.000000e+00> : vector<168x128xf32>
    %45 = tpu.matmul %42, %44, %cst_49 {dimension_numbers = #tpu.dot_dimension_numbers<[1], [0], [0], [1], [0, 0, 1, 1], [], []>} : vector<168x24xbf16>, vector<24x128xbf16>, vector<168x128xf32> -> vector<168x128xf32>
    %46 = arith.addf %40, %45 : vector<168x128xf32>
    %c0_50 = arith.constant 0 : index
    %c0_51 = arith.constant 0 : index
    %c30 = arith.constant 30 : index
    %c0_52 = arith.constant 0 : index
    %47 = vector.load %arg1[%c0_50, %c0_51, %c30, %c0_52] : memref<1x1x210x24xbf16, #tpu.memory_space<vmem>>, vector<1x1x168x24xbf16>
    %48 = vector.shape_cast %47 : vector<1x1x168x24xbf16> to vector<168x24xbf16>
    %c8 = arith.constant 8 : index
    %c0_53 = arith.constant 0 : index
    %c0_54 = arith.constant 0 : index
    %49 = vector.load %arg2[%c8, %c0_53, %c0_54] : memref<9x24x128xbf16, #tpu.memory_space<vmem>>, vector<1x24x128xbf16>
    %50 = vector.shape_cast %49 : vector<1x24x128xbf16> to vector<24x128xbf16>
    %cst_55 = arith.constant dense<0.000000e+00> : vector<168x128xf32>
    %51 = tpu.matmul %48, %50, %cst_55 {dimension_numbers = #tpu.dot_dimension_numbers<[1], [0], [0], [1], [0, 0, 1, 1], [], []>} : vector<168x24xbf16>, vector<24x128xbf16>, vector<168x128xf32> -> vector<168x128xf32>
    %52 = arith.addf %46, %51 : vector<168x128xf32>
    %c0_56 = arith.constant 0 : index
    %c0_57 = arith.constant 0 : index
    %53 = vector.load %arg3[%c0_56, %c0_57] : memref<1x128xf32, #tpu.memory_space<vmem>>, vector<1x128xf32>
    %54 = vector.broadcast %53 : vector<1x128xf32> to vector<168x128xf32>
    %55 = arith.mulf %52, %54 : vector<168x128xf32>
    %c0_58 = arith.constant 0 : index
    %c0_59 = arith.constant 0 : index
    %56 = vector.load %arg4[%c0_58, %c0_59] : memref<1x128xf32, #tpu.memory_space<vmem>>, vector<1x128xf32>
    %57 = vector.broadcast %56 : vector<1x128xf32> to vector<168x128xf32>
    %58 = arith.addf %55, %57 : vector<168x128xf32>
    %cst_60 = arith.constant 0.000000e+00 : f32
    %59 = vector.broadcast %cst_60 : f32 to vector<168x128xf32>
    %60 = arith.maximumf %58, %59 : vector<168x128xf32>
    %c0_61 = arith.constant 0 : index
    %c0_62 = arith.constant 0 : index
    %c0_63 = arith.constant 0 : index
    %61 = vector.load %arg5[%c0_61, %c0_62, %c0_63] : memref<1x168x128xf32, #tpu.memory_space<vmem>>, vector<1x168x128xf32>
    %62 = vector.shape_cast %61 : vector<1x168x128xf32> to vector<168x128xf32>
    %63 = vector.shape_cast %60 : vector<168x128xf32> to vector<1x168x128xf32>
    tpu.vector_store %arg5[%c0_61, %c0_62, %c0_63], %63 {strides = array<i32>} : memref<1x168x128xf32, #tpu.memory_space<vmem>>, vector<1x168x128xf32>,
    return
  }
  func.func @transform_0(%arg0: i32) -> (i32, i32, i32, i32) {
    %c0_i32 = arith.constant 0 : i32
    %c0_i32_0 = arith.constant 0 : i32
    %c0_i32_1 = arith.constant 0 : i32
    %c0_i32_2 = arith.constant 0 : i32
    return %arg0, %c0_i32, %c0_i32_0, %c0_i32_1 : i32, i32, i32, i32
  }
  func.func @transform_1(%arg0: i32) -> (i32, i32, i32) {
    %c0_i32 = arith.constant 0 : i32
    %c0_i32_0 = arith.constant 0 : i32
    %c0_i32_1 = arith.constant 0 : i32
    %c0_i32_2 = arith.constant 0 : i32
    return %c0_i32, %c0_i32_0, %c0_i32_1 : i32, i32, i32
  }
  func.func @transform_2(%arg0: i32) -> (i32, i32) {
    %c0_i32 = arith.constant 0 : i32
    %c0_i32_0 = arith.constant 0 : i32
    %c0_i32_1 = arith.constant 0 : i32
    return %c0_i32, %c0_i32_0 : i32, i32
  }
  func.func @transform_3(%arg0: i32) -> (i32, i32) {
    %c0_i32 = arith.constant 0 : i32
    %c0_i32_0 = arith.constant 0 : i32
    %c0_i32_1 = arith.constant 0 : i32
    return %c0_i32, %c0_i32_0 : i32, i32
  }
  func.func @transform_4(%arg0: i32) -> (i32, i32, i32) {
    %c0_i32 = arith.constant 0 : i32
    %c0_i32_0 = arith.constant 0 : i32
    %c0_i32_1 = arith.constant 0 : i32
    return %arg0, %c0_i32, %c0_i32_0 : i32, i32, i32
  }
}

</mosaic_0001>

<llo_original>
// kernel: tpu_custom_call.1
$region0: #{tpu_custom_call.1}
  #allocation0 [shape = 'u32[]', space=smem, size = 0x4, offset = 0x4, fixed_abs, tag = 'smem constant byte address 0x4 - core index']
  #allocation1 [shape = 'u32[144,128]{1,0:T(1,128)}', space=vmem, size = 0x12000, scoped, tag = 'internal scratch']
  %s0 = inlined_call_operand.vmem [shape: bf16[2,1,210,24], index: 0, kind: input, shape index: {}]
  %s1 = inlined_call_operand.vmem [shape: bf16[9,24,128], index: 1, kind: input, shape index: {}]
  %s2 = inlined_call_operand.vmem [shape: f32[1,128], index: 2, kind: input, shape index: {}]
  %s3 = inlined_call_operand.vmem [shape: f32[1,128], index: 3, kind: input, shape index: {}]
  %s4 = inlined_call_operand.hbm [shape: f32[2,168,128], index: 4, kind: output, shape index: {}]
  %s5 = sld [smem:[#allocation0]]
  $region49: #{tpu_custom_call.1} parent=0
    _
  %s7 = ssub.s32 1, %s5
  %s8 = scalar_select 0, %s7, %s5
  $region1: #{tpu_custom_call.1} parent=0
    #allocation2 [shape = 'u8[172032]{0}', space=vmem, size = 0x2a000, scoped, tag = 'output window, operand 0']
    #allocation3 [shape = 's32[2]{0}', space=sflag, size = 0x8, scoped, tag = 'scoped memory for tpu_custom_call.1']
    %9 = vsyncpa [#allocation3], 0
    %s10 = scalar_lea.sflag [#allocation3], 1
    %11 = vsyncpa %s10, 0
    loop: start=0, step=1, limit=4
    $region2: #{tpu_custom_call.1} parent=1 // loop_pre_header
      _
    $region3: #{tpu_custom_call.1} parent=1 // loop_header
      %s13 = sphi 0, %s17
      %p14 = scmp.ge.s32.totalorder %s13, 4
      %s23 = sphi 0, %s25
      %s26 = sphi 0, %s23
      %s27 = sphi 0, %s26
      %s43 = sphi 0, %s27
      %s47 = sphi 0, %s47
      %s49 = sphi 0, %s47
      %s50 = sphi 0, %s49
      %s64 = sphi 0, %s50
      %s68 = sphi 0, %s68
      %s70 = sphi 0, %s68
      %s71 = sphi 0, %s70
      %s85 = sphi 0, %s71
      %s89 = sphi 0, %s89
      %s91 = sphi 0, %s89
      %s92 = sphi 0, %s91
      %s106 = sphi 0, %s92
      %s112 = sphi 0, %s114
      %s115 = sphi 0, %s112
      %s116 = sphi 0, %s115
      %s132 = sphi 0, %s116
    $region4: #{tpu_custom_call.1} parent=1 // loop_header_branch
      %16 = sbr.rel (%p14) target = $region8
    $region5: #{tpu_custom_call.1} parent=1 // loop_body
      %s18 = ssub.s32 %s13, 1
      %s19 = ssub.s32 %s13, 2
      %s20 = sadd.s32 %s13, 1
      %s21 = ssub.s32 %s13, %s20
      %p22 = scmp.eq.s32.totalorder %s21, 0
      %s24 = sadd.s32 %s23, 1
      %s25 = scalar_select %p22, %s23, %s24
      %p28 = pneg %p22
      %p29 = scmp.eq.s32.totalorder %s13, 1
      %p30 = por %p28, %p29
      %p31 = scmp.ne.s32.totalorder %s23, %s26
      %p32 = scmp.eq.s32.totalorder %s13, 0
      %p33 = por %p31, %p32
      %p34 = scmp.ne.s32.totalorder %s23, %s26
      %p35 = scmp.eq.s32.totalorder %s18, 1
      %p36 = por %p34, %p35
      %p37 = scmp.ne.s32.totalorder %s26, %s27
      %p38 = scmp.eq.s32.totalorder %s18, 0
      %p39 = por %p37, %p38
      %p40 = scmp.ne.s32.totalorder %s26, %s27
      %p41 = scmp.eq.s32.totalorder %s19, 1
      %p42 = por %p40, %p41
      %p44 = scmp.ne.s32.totalorder %s27, %s43
      %p45 = scmp.eq.s32.totalorder %s19, 0
      %p46 = por %p44, %p45
      %s48 = sadd.s32 %s47, 1
      %p51 = scmp.eq.s32.totalorder %s13, 1
      %p52 = scmp.ne.s32.totalorder %s47, %s49
      %p53 = scmp.eq.s32.totalorder %s13, 0
      %p54 = por %p52, %p53
      %p55 = scmp.ne.s32.totalorder %s47, %s49
      %p56 = scmp.eq.s32.totalorder %s18, 1
      %p57 = por %p55, %p56
      %p58 = scmp.ne.s32.totalorder %s49, %s50
      %p59 = scmp.eq.s32.totalorder %s18, 0
      %p60 = por %p58, %p59
      %p61 = scmp.ne.s32.totalorder %s49, %s50
      %p62 = scmp.eq.s32.totalorder %s19, 1
      %p63 = por %p61, %p62
      %p65 = scmp.ne.s32.totalorder %s50, %s64
      %p66 = scmp.eq.s32.totalorder %s19, 0
      %p67 = por %p65, %p66
      %s69 = sadd.s32 %s68, 1
      %p72 = scmp.eq.s32.totalorder %s13, 1
      %p73 = scmp.ne.s32.totalorder %s68, %s70
      %p74 = scmp.eq.s32.totalorder %s13, 0
      %p75 = por %p73, %p74
      %p76 = scmp.ne.s32.totalorder %s68, %s70
      %p77 = scmp.eq.s32.totalorder %s18, 1
      %p78 = por %p76, %p77
      %p79 = scmp.ne.s32.totalorder %s70, %s71
      %p80 = scmp.eq.s32.totalorder %s18, 0
      %p81 = por %p79, %p80
      %p82 = scmp.ne.s32.totalorder %s70, %s71
      %p83 = scmp.eq.s32.totalorder %s19, 1
      %p84 = por %p82, %p83
      %p86 = scmp.ne.s32.totalorder %s71, %s85
      %p87 = scmp.eq.s32.totalorder %s19, 0
      %p88 = por %p86, %p87
      %s90 = sadd.s32 %s89, 1
      %p93 = scmp.eq.s32.totalorder %s13, 1
      %p94 = scmp.ne.s32.totalorder %s89, %s91
      %p95 = scmp.eq.s32.totalorder %s13, 0
      %p96 = por %p94, %p95
      %p97 = scmp.ne.s32.totalorder %s89, %s91
      %p98 = scmp.eq.s32.totalorder %s18, 1
      %p99 = por %p97, %p98
      %p100 = scmp.ne.s32.totalorder %s91, %s92
      %p101 = scmp.eq.s32.totalorder %s18, 0
      %p102 = por %p100, %p101
      %p103 = scmp.ne.s32.totalorder %s91, %s92
      %p104 = scmp.eq.s32.totalorder %s19, 1
      %p105 = por %p103, %p104
      %p107 = scmp.ne.s32.totalorder %s92, %s106
      %p108 = scmp.eq.s32.totalorder %s19, 0
      %p109 = por %p107, %p108
      %s110 = ssub.s32 %s13, %s20
      %p111 = scmp.eq.s32.totalorder %s110, 0
      %s113 = sadd.s32 %s112, 1
      %s114 = scalar_select %p111, %s112, %s113
      %p117 = pneg %p111
      %p118 = scmp.eq.s32.totalorder %s13, 1
      %p119 = por %p117, %p118
      %p120 = scmp.ne.s32.totalorder %s112, %s115
      %p121 = scmp.eq.s32.totalorder %s13, 0
      %p122 = por %p120, %p121
      %p123 = scmp.ne.s32.totalorder %s112, %s115
      %p124 = scmp.eq.s32.totalorder %s18, 1
      %p125 = por %p123, %p124
      %p126 = scmp.ne.s32.totalorder %s115, %s116
      %p127 = scmp.eq.s32.totalorder %s18, 0
      %p128 = por %p126, %p127
      %p129 = scmp.ne.s32.totalorder %s115, %s116
      %p130 = scmp.eq.s32.totalorder %s19, 1
      %p131 = por %p129, %p130
      %p133 = scmp.ne.s32.totalorder %s116, %s132
      %p134 = scmp.eq.s32.totalorder %s19, 0
      %p135 = por %p133, %p134
      %p136 = scmp.le.s32.totalorder 1, %s13
      %p137 = scmp.lt.s32.totalorder %s13, 3
      %p138 = pnand %p136, %p137
      %p139 = pneg %p138
      // Predicated region
      $region9: #{tpu_custom_call.1} parent=5 // pred_check
        _
      $region10: #{tpu_custom_call.1} parent=5 // pred_check_branch
        %141 = sbr.rel (%p138) target = $region12
      $region11: #{tpu_custom_call.1} parent=5 // pred_region
        %s142 = ssub.s32 %s13, 1
        // Predicated region
        $region13: #{tpu_custom_call.1} parent=11 // pred_check
          %p143 = pneg %p60
        $region14: #{tpu_custom_call.1} parent=11 // pred_check_branch
          %145 = sbr.rel (%p143) target = $region16
        $region15: #{tpu_custom_call.1} parent=11 // pred_region
          _
        $region16: #{tpu_custom_call.1} parent=11 // pred_fallthru
          _
        // Predicated region
        $region17: #{tpu_custom_call.1} parent=11 // pred_check
          %p146 = pneg %p81
        $region18: #{tpu_custom_call.1} parent=11 // pred_check_branch
          %148 = sbr.rel (%p146) target = $region20
        $region19: #{tpu_custom_call.1} parent=11 // pred_region
          _
        $region20: #{tpu_custom_call.1} parent=11 // pred_fallthru
          _
        // Predicated region
        $region21: #{tpu_custom_call.1} parent=11 // pred_check
          %p149 = pneg %p102
        $region22: #{tpu_custom_call.1} parent=11 // pred_check_branch
          %151 = sbr.rel (%p149) target = $region24
        $region23: #{tpu_custom_call.1} parent=11 // pred_region
          _
        $region24: #{tpu_custom_call.1} parent=11 // pred_fallthru
          _
      $region12: #{tpu_custom_call.1} parent=5 // pred_fallthru
        _
      %p152 = scmp.lt.s32.totalorder %s13, 2
      // Predicated region
      $region25: #{tpu_custom_call.1} parent=5 // pred_check
        %p153 = pneg %p152
      $region26: #{tpu_custom_call.1} parent=5 // pred_check_branch
        %155 = sbr.rel (%p153) target = $region28
      $region27: #{tpu_custom_call.1} parent=5 // pred_region
        // Predicated region
        $region29: #{tpu_custom_call.1} parent=27 // pred_check
          %p156 = pneg %p33
        $region30: #{tpu_custom_call.1} parent=27 // pred_check_branch
          %158 = sbr.rel (%p156) target = $region32
        $region31: #{tpu_custom_call.1} parent=27 // pred_region
          %p159 = scmp.lt.s32.totalorder %s13, 1
          %s160 = scalar_select %p159, %s13, 1
          %s161 = smul.addr %s160, 27
          %s162 = smul.addr %s161, 4
          %s163 = scalar_lea.vmem %s0, %s162
        $region32: #{tpu_custom_call.1} parent=27 // pred_fallthru
          _
      $region28: #{tpu_custom_call.1} parent=5 // pred_fallthru
        _
      %p164 = scmp.le.s32.totalorder 1, %s13
      %p165 = scmp.lt.s32.totalorder %s13, 3
      %p166 = pnand %p164, %p165
      %p167 = pneg %p166
      // Predicated region
      $region33: #{tpu_custom_call.1} parent=5 // pred_check
        _
      $region34: #{tpu_custom_call.1} parent=5 // pred_check_branch
        %169 = sbr.rel (%p166) target = $region36
      $region35: #{tpu_custom_call.1} parent=5 // pred_region
        %s170 = ssub.s32 %s13, 1
        %p171 = scmp.lt.s32.totalorder %s18, 1
        %s172 = scalar_select %p171, %s18, 1
        %s173 = smul.addr %s172, 27
        %s174 = smul.addr %s173, 4
        %s175 = scalar_lea.vmem %s0, %s174
        %p176 = pneg %p39
        %p177 = pneg %p36
        %p178 = pneg %p60
        %p179 = pneg %p57
        %p180 = pneg %p81
        %p181 = pneg %p78
        %p182 = pneg %p102
        %p183 = pneg %p99
        %p184 = pneg %p128
        %p185 = pneg %p125
        %s186 = sand.u32 %s115, 1
        %s187 = scalar_lea.sflag [#allocation3], %s186
        %s188 = sand.u32 %s115, 1
        %s189 = smul.addr %s188, 168
        %s190 = scalar_lea.vmem [#allocation2], %s189
        %p191 = scmp.lt.s32.totalorder %s18, 1
        %s192 = scalar_select %p191, %s18, 1
        %s193 = smul.addr %s192, 27
        %s194 = smul.addr %s193, 4
        %s195 = scalar_lea.vmem %s0, %s194
        %v197 = vld [vmem:[%s195] sm:$0xf]
        %v198 = vld [vmem:[%s195 + $0x4] sm:$0xf]
        %v199 = vld [vmem:[%s195 + $0x8] sm:$0xf]
        %v200 = vld [vmem:[%s195 + $0xc] sm:$0xf]
        %v201 = vld [vmem:[%s195 + $0x10] sm:$0xf]
        %v202 = vld [vmem:[%s195 + $0x14] sm:$0xf]
        %v203 = vld [vmem:[%s195 + $0x18] sm:$0xf]
        %v204 = vld [vmem:[%s195 + $0x1c] sm:$0xf]
        %v205 = vld [vmem:[%s195 + $0x20] sm:$0xf]
        %v206 = vld [vmem:[%s195 + $0x24] sm:$0xf]
        %v207 = vld [vmem:[%s195 + $0x28] sm:$0xf]
        %v208 = vld [vmem:[%s195 + $0x2c] sm:$0xf]
        %v209 = vld [vmem:[%s195 + $0x30] sm:$0xf]
        %v210 = vld [vmem:[%s195 + $0x34] sm:$0xf]
        %v211 = vld [vmem:[%s195 + $0x38] sm:$0xf]
        %v212 = vld [vmem:[%s195 + $0x3c] sm:$0xf]
        %v213 = vld [vmem:[%s195 + $0x40] sm:$0xf]
        %v214 = vld [vmem:[%s195 + $0x44] sm:$0xf]
        %v215 = vld [vmem:[%s195 + $0x48] sm:$0xf]
        %v216 = vld [vmem:[%s195 + $0x4c] sm:$0xf]
        %v217 = vld [vmem:[%s195 + $0x50] sm:$0xf]
        %v218 = vld [vmem:[%s1] sm:$0xf]
        %v219 = vld [vmem:[%s1 + $0x4] sm:$0xf]
        %v220 = vld [vmem:[%s1 + $0x8] sm:$0xf]
        %v221 = vld [vmem:[%s195 + $0x54] sm:$0x1]
        %s222 = scalar_lea.vmem %s1, 12
        %v223 = vld [vmem:[%s222] sm:$0xf]
        %v224 = vld [vmem:[%s222 + $0x4] sm:$0xf]
        %v225 = vld [vmem:[%s222 + $0x8] sm:$0xf]
        %v248 = vunpack.c.l.b16 %v197
        %v249 = vunpack.c.l.b16 %v198
        %v250 = vunpack.c.l.b16 %v199
        %v251 = vunpack.c.l.b16 %v200
        %v252 = vunpack.c.l.b16 %v201
        %v253 = vunpack.c.l.b16 %v202
        %v254 = vunpack.c.l.b16 %v203
        %v255 = vunpack.c.l.b16 %v204
        %v256 = vunpack.c.l.b16 %v205
        %v257 = vunpack.c.l.b16 %v206
        %v258 = vunpack.c.l.b16 %v207
        %v259 = vunpack.c.l.b16 %v208
        %v260 = vunpack.c.l.b16 %v209
        %v261 = vunpack.c.l.b16 %v210
        %v262 = vunpack.c.l.b16 %v211
        %v263 = vunpack.c.l.b16 %v212
        %v264 = vunpack.c.l.b16 %v213
        %v265 = vunpack.c.l.b16 %v214
        %v266 = vunpack.c.l.b16 %v215
        %v267 = vunpack.c.l.b16 %v216
        %v268 = vunpack.c.l.b16 %v217
        %v269 = vunpack.c.l.b16 %v221
        %v270 = vpack.c.b16 %v249, %v248
        %v271 = vpack.c.b16 %v251, %v250
        %v272 = vpack.c.b16 %v253, %v252
        %v273 = vpack.c.b16 %v255, %v254
        %v274 = vpack.c.b16 %v257, %v256
        %v275 = vpack.c.b16 %v259, %v258
        %v276 = vpack.c.b16 %v261, %v260
        %v277 = vpack.c.b16 %v263, %v262
        %v278 = vpack.c.b16 %v265, %v264
        %v279 = vpack.c.b16 %v267, %v266
        %v280 = vpack.c.b16 %v269, %v268
        %vm281 = vsmask.f32 7424
        %v283 = vshrl.u32 %v270, 16
        %v285 = vshll.u32 %v270, 16
        %v287 = vrot.slane %v285, 1
        %v288 = vor.u32 %v283, %v287
        %v290 = vshll.u32 %v271, 16
        %v292 = vrot.slane %v290, 1
        %v293 = vsel %vm281, %v288, %v292
        %v294 = vshrl.u32 %v271, 16
        %v296 = vor.u32 %v294, %v292
        %v298 = vshll.u32 %v272, 16
        %v300 = vrot.slane %v298, 1
        %v301 = vsel %vm281, %v296, %v300
        %v302 = vshrl.u32 %v272, 16
        %v304 = vor.u32 %v302, %v300
        %v306 = vshll.u32 %v273, 16
        %v308 = vrot.slane %v306, 1
        %v309 = vsel %vm281, %v304, %v308
        %v310 = vshrl.u32 %v273, 16
        %v312 = vor.u32 %v310, %v308
        %v314 = vshll.u32 %v274, 16
        %v316 = vrot.slane %v314, 1
        %v317 = vsel %vm281, %v312, %v316
        %v318 = vshrl.u32 %v274, 16
        %v320 = vor.u32 %v318, %v316
        %v322 = vshll.u32 %v275, 16
        %v324 = vrot.slane %v322, 1
        %v325 = vsel %vm281, %v320, %v324
        %v326 = vshrl.u32 %v275, 16
        %v328 = vor.u32 %v326, %v324
        %v330 = vshll.u32 %v276, 16
        %v332 = vrot.slane %v330, 1
        %v333 = vsel %vm281, %v328, %v332
        %v334 = vshrl.u32 %v276, 16
        %v336 = vor.u32 %v334, %v332
        %v338 = vshll.u32 %v277, 16
        %v340 = vrot.slane %v338, 1
        %v341 = vsel %vm281, %v336, %v340
        %v342 = vshrl.u32 %v277, 16
        %v344 = vor.u32 %v342, %v340
        %v346 = vshll.u32 %v278, 16
        %v348 = vrot.slane %v346, 1
        %v349 = vsel %vm281, %v344, %v348
        %v350 = vshrl.u32 %v278, 16
        %v352 = vor.u32 %v350, %v348
        %v354 = vshll.u32 %v279, 16
        %v356 = vrot.slane %v354, 1
        %v357 = vsel %vm281, %v352, %v356
        %v358 = vshrl.u32 %v279, 16
        %v360 = vor.u32 %v358, %v356
        %v362 = vshll.u32 %v280, 16
        %v364 = vrot.slane %v362, 1
        %v365 = vsel %vm281, %v360, %v364
        %v366 = vshrl.u32 %v280, 16
        %v368 = vor.u32 %v366, %v364
        %v372 = vunpack.c.l.b16 %v223
        %v373 = vunpack.c.l.b16 %v224
        %v374 = vunpack.c.l.b16 %v225
        %v375 = vpack.c.b16 %v373, %v372
        %v376 = vpack.c.b16 %v374, %v374
        %vm378 = vcmask 195584
        %v380 = vsel %vm378, %v293, 0
        %v383 = vsel %vm378, %v301, 0
        %v386 = vsel %vm378, %v309, 0
        %v389 = vsel %vm378, %v317, 0
        %v392 = vsel %vm378, %v325, 0
        %v395 = vsel %vm378, %v333, 0
        %v398 = vsel %vm378, %v341, 0
        %v401 = vsel %vm378, %v349, 0
        %v404 = vsel %vm378, %v357, 0
        %v407 = vsel %vm378, %v365, 0
        %v410 = vsel %vm378, %v368, 0
        %vm412 = vcmask 1043456
        %v414 = vsel %vm412, %v376, 0
        %416 = vmatprep.subr.bf16.mxu0 0
        %417 = vmatpush1.bf16.msra.mxu0 0
        %418 = vmatprep.subr.bf16.mxu0 0
        %419 = vmatpush1.bf16.msra.mxu0 0
        %420 = vmatprep.subr.bf16.mxu0 0
        %421 = vmatpush1.bf16.msra.mxu0 0
        %422 = vmatprep.subr.bf16.mxu0 0
        %423 = vmatpush1.bf16.msra.mxu0 0
        %424 = vmatprep.subr.bf16.mxu0 0
        %425 = vmatpush1.bf16.msra.mxu0 0
        %426 = vmatprep.subr.bf16.mxu0 0
        %427 = vmatpush1.bf16.msra.mxu0 0
        %428 = vmatprep.subr.bf16.mxu0 0
        %429 = vmatpush1.bf16.msra.mxu0 %v414
        %430 = vmatprep.subr.bf16.mxu0 0
        %431 = vmatpush1.bf16.msra.mxu0 %v375
        %432 = vmatprep.subr.bf16.mxu0 0
        %433 = vmatpush2.bf16.msra.mxu0 0
        %434 = vmatprep.subr.bf16.mxu0 0
        %435 = vmatpush2.bf16.msra.mxu0 0
        %436 = vmatprep.subr.bf16.mxu0 0
        %437 = vmatpush2.bf16.msra.mxu0 0
        %438 = vmatprep.subr.bf16.mxu0 0
        %439 = vmatpush2.bf16.msra.mxu0 0
        %440 = vmatprep.subr.bf16.mxu0 0
        %441 = vmatpush2.bf16.msra.mxu0 0
        %442 = vmatprep.subr.bf16.mxu0 0
        %443 = vmatpush2.bf16.msra.mxu0 0
        %444 = vmatprep.subr.bf16.mxu0 0
        %445 = vmatpush2.bf16.msra.mxu0 0
        %446 = vmatprep.subr.bf16.mxu0 0
        %447 = vmatpush2.bf16.msra.mxu0 0
        %448 = vmatprep.mubr.bf16.mxu0 0
        %449 = vmatmul.mubr.bf16.gmra.mxu0 %v380
        %v450 = vpop.f32.mrf.mxu0
        %v451 = vadd.f32 0.0, %v450
        %v452 = vpop.f32.mrf.mxu0
        %v453 = vpop.f32.mrf.mxu0
        %v454 = vadd.f32 0.0, %v453
        %v455 = vpop.f32.mrf.mxu0
        %456 = vmatprep.mubr.bf16.mxu0 0
        %457 = vmatmul.mubr.bf16.gmra.mxu0 %v383
        %v458 = vpop.f32.mrf.mxu0
        %v459 = vadd.f32 0.0, %v458
        %v460 = vpop.f32.mrf.mxu0
        %v461 = vpop.f32.mrf.mxu0
        %v462 = vadd.f32 0.0, %v461
        %v463 = vpop.f32.mrf.mxu0
        %464 = vmatprep.mubr.bf16.mxu0 0
        %465 = vmatmul.mubr.bf16.gmra.mxu0 %v386
        %v466 = vpop.f32.mrf.mxu0
        %v467 = vadd.f32 0.0, %v466
        %v468 = vpop.f32.mrf.mxu0
        %v469 = vpop.f32.mrf.mxu0
        %v470 = vadd.f32 0.0, %v469
        %v471 = vpop.f32.mrf.mxu0
        %472 = vmatprep.mubr.bf16.mxu0 0
        %473 = vmatmul.mubr.bf16.gmra.mxu0 %v389
        %v474 = vpop.f32.mrf.mxu0
        %v475 = vadd.f32 0.0, %v474
        %v476 = vpop.f32.mrf.mxu0
        %v477 = vpop.f32.mrf.mxu0
        %v478 = vadd.f32 0.0, %v477
        %v479 = vpop.f32.mrf.mxu0
        %480 = vmatprep.mubr.bf16.mxu0 0
        %481 = vmatmul.mubr.bf16.gmra.mxu0 %v392
        %v482 = vpop.f32.mrf.mxu0
        %v483 = vadd.f32 0.0, %v482
        %v484 = vpop.f32.mrf.mxu0
        %v485 = vpop.f32.mrf.mxu0
        %v486 = vadd.f32 0.0, %v485
        %v487 = vpop.f32.mrf.mxu0
        %488 = vmatprep.mubr.bf16.mxu0 0
        %489 = vmatmul.mubr.bf16.gmra.mxu0 %v395
        %v490 = vpop.f32.mrf.mxu0
        %v491 = vadd.f32 0.0, %v490
        %v492 = vpop.f32.mrf.mxu0
        %v493 = vpop.f32.mrf.mxu0
        %v494 = vadd.f32 0.0, %v493
        %v495 = vpop.f32.mrf.mxu0
        %496 = vmatprep.mubr.bf16.mxu0 0
        %497 = vmatmul.mubr.bf16.gmra.mxu0 %v398
        %v498 = vpop.f32.mrf.mxu0
        %v499 = vadd.f32 0.0, %v498
        %v500 = vpop.f32.mrf.mxu0
        %v501 = vpop.f32.mrf.mxu0
        %v502 = vadd.f32 0.0, %v501
        %v503 = vpop.f32.mrf.mxu0
        %504 = vmatprep.mubr.bf16.mxu0 0
        %505 = vmatmul.mubr.bf16.gmra.mxu0 %v401
        %v506 = vpop.f32.mrf.mxu0
        %v507 = vadd.f32 0.0, %v506
        %v508 = vpop.f32.mrf.mxu0
        %v509 = vpop.f32.mrf.mxu0
        %v510 = vadd.f32 0.0, %v509
        %v511 = vpop.f32.mrf.mxu0
        %512 = vmatprep.mubr.bf16.mxu0 0
        %513 = vmatmul.mubr.bf16.gmra.mxu0 %v404
        %v514 = vpop.f32.mrf.mxu0
        %v515 = vadd.f32 0.0, %v514
        %v516 = vpop.f32.mrf.mxu0
        %v517 = vpop.f32.mrf.mxu0
        %v518 = vadd.f32 0.0, %v517
        %v519 = vpop.f32.mrf.mxu0
        %520 = vmatprep.mubr.bf16.mxu0 0
        %521 = vmatmul.mubr.bf16.gmra.mxu0 %v407
        %v522 = vpop.f32.mrf.mxu0
        %v523 = vadd.f32 0.0, %v522
        %v524 = vpop.f32.mrf.mxu0
        %v525 = vpop.f32.mrf.mxu0
        %v526 = vadd.f32 0.0, %v525
        %v527 = vpop.f32.mrf.mxu0
        %528 = vmatprep.mubr.bf16.mxu0 0
        %529 = vmatmul.mubr.bf16.gmra.mxu0 %v410
        %v530 = vpop.f32.mrf.mxu0
        %v531 = vadd.f32 0.0, %v530
        %v532 = vpop.f32.mrf.mxu0
        %v533 = vpop.f32.mrf.mxu0
        %v534 = vpop.f32.mrf.mxu0
        %535 = vdwg.mxu0
        %v536 = vpack.c.b16 %v268, %v268
        %v540 = vunpack.c.l.b16 %v218
        %v541 = vunpack.c.l.b16 %v219
        %v542 = vunpack.c.l.b16 %v220
        %v543 = vpack.c.b16 %v541, %v540
        %v544 = vpack.c.b16 %v542, %v542
        %v546 = vsel %vm378, %v270, 0
        %v548 = vsel %vm378, %v271, 0
        %v550 = vsel %vm378, %v272, 0
        %v552 = vsel %vm378, %v273, 0
        %v554 = vsel %vm378, %v274, 0
        %v556 = vsel %vm378, %v275, 0
        %v558 = vsel %vm378, %v276, 0
        %v560 = vsel %vm378, %v277, 0
        %v562 = vsel %vm378, %v278, 0
        %v564 = vsel %vm378, %v279, 0
        %v567 = vsel %vm378, %v536, 0
        %v570 = vsel %vm412, %v544, 0
        %572 = vmatprep.subr.bf16.mxu0 0
        %573 = vmatpush1.bf16.msra.mxu0 0
        %574 = vmatprep.subr.bf16.mxu0 0
        %575 = vmatpush1.bf16.msra.mxu0 0
        %576 = vmatprep.subr.bf16.mxu0 0
        %577 = vmatpush1.bf16.msra.mxu0 0
        %578 = vmatprep.subr.bf16.mxu0 0
        %579 = vmatpush1.bf16.msra.mxu0 0
        %580 = vmatprep.subr.bf16.mxu0 0
        %581 = vmatpush1.bf16.msra.mxu0 0
        %582 = vmatprep.subr.bf16.mxu0 0
        %583 = vmatpush1.bf16.msra.mxu0 0
        %584 = vmatprep.subr.bf16.mxu0 0
        %585 = vmatpush1.bf16.msra.mxu0 %v570
        %586 = vmatprep.subr.bf16.mxu0 0
        %587 = vmatpush1.bf16.msra.mxu0 %v543
        %588 = vmatprep.subr.bf16.mxu0 0
        %589 = vmatpush2.bf16.msra.mxu0 0
        %590 = vmatprep.subr.bf16.mxu0 0
        %591 = vmatpush2.bf16.msra.mxu0 0
        %592 = vmatprep.subr.bf16.mxu0 0
        %593 = vmatpush2.bf16.msra.mxu0 0
        %594 = vmatprep.subr.bf16.mxu0 0
        %595 = vmatpush2.bf16.msra.mxu0 0
        %596 = vmatprep.subr.bf16.mxu0 0
        %597 = vmatpush2.bf16.msra.mxu0 0
        %598 = vmatprep.subr.bf16.mxu0 0
        %599 = vmatpush2.bf16.msra.mxu0 0
        %600 = vmatprep.subr.bf16.mxu0 0
        %601 = vmatpush2.bf16.msra.mxu0 0
        %602 = vmatprep.subr.bf16.mxu0 0
        %603 = vmatpush2.bf16.msra.mxu0 0
        %604 = vmatprep.mubr.bf16.mxu0 0
        %605 = vmatmul.mubr.bf16.gmra.mxu0 %v546
        %v606 = vpop.f32.mrf.mxu0
        %v607 = vadd.f32 %v451, %v606
        %v608 = vpop.f32.mrf.mxu0
        %v609 = vpop.f32.mrf.mxu0
        %v610 = vadd.f32 %v454, %v609
        %v611 = vpop.f32.mrf.mxu0
        %612 = vmatprep.mubr.bf16.mxu0 0
        %613 = vmatmul.mubr.bf16.gmra.mxu0 %v548
        %v614 = vpop.f32.mrf.mxu0
        %v615 = vadd.f32 %v459, %v614
        %v616 = vpop.f32.mrf.mxu0
        %v617 = vpop.f32.mrf.mxu0
        %v618 = vadd.f32 %v462, %v617
        %v619 = vpop.f32.mrf.mxu0
        %620 = vmatprep.mubr.bf16.mxu0 0
        %621 = vmatmul.mubr.bf16.gmra.mxu0 %v550
        %v622 = vpop.f32.mrf.mxu0
        %v623 = vadd.f32 %v467, %v622
        %v624 = vpop.f32.mrf.mxu0
        %v625 = vpop.f32.mrf.mxu0
        %v626 = vadd.f32 %v470, %v625
        %v627 = vpop.f32.mrf.mxu0
        %628 = vmatprep.mubr.bf16.mxu0 0
        %629 = vmatmul.mubr.bf16.gmra.mxu0 %v552
        %v630 = vpop.f32.mrf.mxu0
        %v631 = vadd.f32 %v475, %v630
        %v632 = vpop.f32.mrf.mxu0
        %v633 = vpop.f32.mrf.mxu0
        %v634 = vadd.f32 %v478, %v633
        %v635 = vpop.f32.mrf.mxu0
        %636 = vmatprep.mubr.bf16.mxu0 0
        %637 = vmatmul.mubr.bf16.gmra.mxu0 %v554
        %v638 = vpop.f32.mrf.mxu0
        %v639 = vadd.f32 %v483, %v638
        %v640 = vpop.f32.mrf.mxu0
        %v641 = vpop.f32.mrf.mxu0
        %v642 = vadd.f32 %v486, %v641
        %v643 = vpop.f32.mrf.mxu0
        %644 = vmatprep.mubr.bf16.mxu0 0
        %645 = vmatmul.mubr.bf16.gmra.mxu0 %v556
        %v646 = vpop.f32.mrf.mxu0
        %v647 = vadd.f32 %v491, %v646
        %v648 = vpop.f32.mrf.mxu0
        %v649 = vpop.f32.mrf.mxu0
        %v650 = vadd.f32 %v494, %v649
        %v651 = vpop.f32.mrf.mxu0
        %652 = vmatprep.mubr.bf16.mxu0 0
        %653 = vmatmul.mubr.bf16.gmra.mxu0 %v558
        %v654 = vpop.f32.mrf.mxu0
        %v655 = vadd.f32 %v499, %v654
        %v656 = vpop.f32.mrf.mxu0
        %v657 = vpop.f32.mrf.mxu0
        %v658 = vadd.f32 %v502, %v657
        %v659 = vpop.f32.mrf.mxu0
        %660 = vmatprep.mubr.bf16.mxu0 0
        %661 = vmatmul.mubr.bf16.gmra.mxu0 %v560
        %v662 = vpop.f32.mrf.mxu0
        %v663 = vadd.f32 %v507, %v662
        %v664 = vpop.f32.mrf.mxu0
        %v665 = vpop.f32.mrf.mxu0
        %v666 = vadd.f32 %v510, %v665
        %v667 = vpop.f32.mrf.mxu0
        %668 = vmatprep.mubr.bf16.mxu0 0
        %669 = vmatmul.mubr.bf16.gmra.mxu0 %v562
        %v670 = vpop.f32.mrf.mxu0
        %v671 = vadd.f32 %v515, %v670
        %v672 = vpop.f32.mrf.mxu0
        %v673 = vpop.f32.mrf.mxu0
        %v674 = vadd.f32 %v518, %v673
        %v675 = vpop.f32.mrf.mxu0
        %676 = vmatprep.mubr.bf16.mxu0 0
        %677 = vmatmul.mubr.bf16.gmra.mxu0 %v564
        %v678 = vpop.f32.mrf.mxu0
        %v679 = vadd.f32 %v523, %v678
        %v680 = vpop.f32.mrf.mxu0
        %v681 = vpop.f32.mrf.mxu0
        %v682 = vadd.f32 %v526, %v681
        %v683 = vpop.f32.mrf.mxu0
        %684 = vmatprep.mubr.bf16.mxu0 0
        %685 = vmatmul.mubr.bf16.gmra.mxu0 %v567
        %v686 = vpop.f32.mrf.mxu0
        %v687 = vadd.f32 %v531, %v686
        %v688 = vpop.f32.mrf.mxu0
        %v689 = vpop.f32.mrf.mxu0
        %v690 = vpop.f32.mrf.mxu0
        %691 = vdwg.mxu0
        %v692 = vld [vmem:[%s195] sm:$0xe]
        %s693 = scalar_lea.vmem %s1, 24
        %v694 = vld [vmem:[%s693] sm:$0xf]
        %v695 = vld [vmem:[%s693 + $0x4] sm:$0xf]
        %v696 = vld [vmem:[%s693 + $0x8] sm:$0xf]
        %v698 = vunpack.c.l.b16 %v692
        %v699 = vpack.c.b16 %v249, %v698
        %vm700 = vcmask 1046528
        %v701 = vrot.slane %v699, 1
        %v702 = vrot.slane %v271, 1
        %v703 = vsel %vm700, %v701, %v702
        %v704 = vrot.slane %v272, 1
        %v705 = vsel %vm700, %v702, %v704
        %v706 = vrot.slane %v273, 1
        %v707 = vsel %vm700, %v704, %v706
        %v708 = vrot.slane %v274, 1
        %v709 = vsel %vm700, %v706, %v708
        %v710 = vrot.slane %v275, 1
        %v711 = vsel %vm700, %v708, %v710
        %v712 = vrot.slane %v276, 1
        %v713 = vsel %vm700, %v710, %v712
        %v714 = vrot.slane %v277, 1
        %v715 = vsel %vm700, %v712, %v714
        %v716 = vrot.slane %v278, 1
        %v717 = vsel %vm700, %v714, %v716
        %v718 = vrot.slane %v279, 1
        %v719 = vsel %vm700, %v716, %v718
        %v720 = vrot.slane %v280, 1
        %v721 = vsel %vm700, %v718, %v720
        %v725 = vunpack.c.l.b16 %v694
        %v726 = vunpack.c.l.b16 %v695
        %v727 = vunpack.c.l.b16 %v696
        %v728 = vpack.c.b16 %v726, %v725
        %v729 = vpack.c.b16 %v727, %v727
        %v732 = vsel %vm378, %v703, 0
        %v735 = vsel %vm378, %v705, 0
        %v738 = vsel %vm378, %v707, 0
        %v741 = vsel %vm378, %v709, 0
        %v744 = vsel %vm378, %v711, 0
        %v747 = vsel %vm378, %v713, 0
        %v750 = vsel %vm378, %v715, 0
        %v753 = vsel %vm378, %v717, 0
        %v756 = vsel %vm378, %v719, 0
        %v759 = vsel %vm378, %v721, 0
        %v762 = vsel %vm378, %v720, 0
        %v765 = vsel %vm412, %v729, 0
        %767 = vmatprep.subr.bf16.mxu0 0
        %768 = vmatpush1.bf16.msra.mxu0 0
        %769 = vmatprep.subr.bf16.mxu0 0
        %770 = vmatpush1.bf16.msra.mxu0 0
        %771 = vmatprep.subr.bf16.mxu0 0
        %772 = vmatpush1.bf16.msra.mxu0 0
        %773 = vmatprep.subr.bf16.mxu0 0
        %774 = vmatpush1.bf16.msra.mxu0 0
        %775 = vmatprep.subr.bf16.mxu0 0
        %776 = vmatpush1.bf16.msra.mxu0 0
        %777 = vmatprep.subr.bf16.mxu0 0
        %778 = vmatpush1.bf16.msra.mxu0 0
        %779 = vmatprep.subr.bf16.mxu0 0
        %780 = vmatpush1.bf16.msra.mxu0 %v765
        %781 = vmatprep.subr.bf16.mxu0 0
        %782 = vmatpush1.bf16.msra.mxu0 %v728
        %783 = vmatprep.subr.bf16.mxu0 0
        %784 = vmatpush2.bf16.msra.mxu0 0
        %785 = vmatprep.subr.bf16.mxu0 0
        %786 = vmatpush2.bf16.msra.mxu0 0
        %787 = vmatprep.subr.bf16.mxu0 0
        %788 = vmatpush2.bf16.msra.mxu0 0
        %789 = vmatprep.subr.bf16.mxu0 0
        %790 = vmatpush2.bf16.msra.mxu0 0
        %791 = vmatprep.subr.bf16.mxu0 0
        %792 = vmatpush2.bf16.msra.mxu0 0
        %793 = vmatprep.subr.bf16.mxu0 0
        %794 = vmatpush2.bf16.msra.mxu0 0
        %795 = vmatprep.subr.bf16.mxu0 0
        %796 = vmatpush2.bf16.msra.mxu0 0
        %797 = vmatprep.subr.bf16.mxu0 0
        %798 = vmatpush2.bf16.msra.mxu0 0
        %799 = vmatprep.mubr.bf16.mxu0 0
        %800 = vmatmul.mubr.bf16.gmra.mxu0 %v732
        %v801 = vpop.f32.mrf.mxu0
        %v802 = vadd.f32 0.0, %v801
        %v803 = vpop.f32.mrf.mxu0
        %v804 = vpop.f32.mrf.mxu0
        %v805 = vadd.f32 0.0, %v804
        %v806 = vpop.f32.mrf.mxu0
        %807 = vmatprep.mubr.bf16.mxu0 0
        %808 = vmatmul.mubr.bf16.gmra.mxu0 %v735
        %v809 = vpop.f32.mrf.mxu0
        %v810 = vadd.f32 0.0, %v809
        %v811 = vpop.f32.mrf.mxu0
        %v812 = vpop.f32.mrf.mxu0
        %v813 = vadd.f32 0.0, %v812
        %v814 = vpop.f32.mrf.mxu0
        %815 = vmatprep.mubr.bf16.mxu0 0
        %816 = vmatmul.mubr.bf16.gmra.mxu0 %v738
        %v817 = vpop.f32.mrf.mxu0
        %v818 = vadd.f32 0.0, %v817
        %v819 = vpop.f32.mrf.mxu0
        %v820 = vpop.f32.mrf.mxu0
        %v821 = vadd.f32 0.0, %v820
        %v822 = vpop.f32.mrf.mxu0
        %823 = vmatprep.mubr.bf16.mxu0 0
        %824 = vmatmul.mubr.bf16.gmra.mxu0 %v741
        %v825 = vpop.f32.mrf.mxu0
        %v826 = vadd.f32 0.0, %v825
        %v827 = vpop.f32.mrf.mxu0
        %v828 = vpop.f32.mrf.mxu0
        %v829 = vadd.f32 0.0, %v828
        %v830 = vpop.f32.mrf.mxu0
        %831 = vmatprep.mubr.bf16.mxu0 0
        %832 = vmatmul.mubr.bf16.gmra.mxu0 %v744
        %v833 = vpop.f32.mrf.mxu0
        %v834 = vadd.f32 0.0, %v833
        %v835 = vpop.f32.mrf.mxu0
        %v836 = vpop.f32.mrf.mxu0
        %v837 = vadd.f32 0.0, %v836
        %v838 = vpop.f32.mrf.mxu0
        %839 = vmatprep.mubr.bf16.mxu0 0
        %840 = vmatmul.mubr.bf16.gmra.mxu0 %v747
        %v841 = vpop.f32.mrf.mxu0
        %v842 = vadd.f32 0.0, %v841
        %v843 = vpop.f32.mrf.mxu0
        %v844 = vpop.f32.mrf.mxu0
        %v845 = vadd.f32 0.0, %v844
        %v846 = vpop.f32.mrf.mxu0
        %847 = vmatprep.mubr.bf16.mxu0 0
        %848 = vmatmul.mubr.bf16.gmra.mxu0 %v750
        %v849 = vpop.f32.mrf.mxu0
        %v850 = vadd.f32 0.0, %v849
        %v851 = vpop.f32.mrf.mxu0
        %v852 = vpop.f32.mrf.mxu0
        %v853 = vadd.f32 0.0, %v852
        %v854 = vpop.f32.mrf.mxu0
        %855 = vmatprep.mubr.bf16.mxu0 0
        %856 = vmatmul.mubr.bf16.gmra.mxu0 %v753
        %v857 = vpop.f32.mrf.mxu0
        %v858 = vadd.f32 0.0, %v857
        %v859 = vpop.f32.mrf.mxu0
        %v860 = vpop.f32.mrf.mxu0
        %v861 = vadd.f32 0.0, %v860
        %v862 = vpop.f32.mrf.mxu0
        %863 = vmatprep.mubr.bf16.mxu0 0
        %864 = vmatmul.mubr.bf16.gmra.mxu0 %v756
        %v865 = vpop.f32.mrf.mxu0
        %v866 = vadd.f32 0.0, %v865
        %v867 = vpop.f32.mrf.mxu0
        %v868 = vpop.f32.mrf.mxu0
        %v869 = vadd.f32 0.0, %v868
        %v870 = vpop.f32.mrf.mxu0
        %871 = vmatprep.mubr.bf16.mxu0 0
        %872 = vmatmul.mubr.bf16.gmra.mxu0 %v759
        %v873 = vpop.f32.mrf.mxu0
        %v874 = vadd.f32 0.0, %v873
        %v875 = vpop.f32.mrf.mxu0
        %v876 = vpop.f32.mrf.mxu0
        %v877 = vadd.f32 0.0, %v876
        %v878 = vpop.f32.mrf.mxu0
        %879 = vmatprep.mubr.bf16.mxu0 0
        %880 = vmatmul.mubr.bf16.gmra.mxu0 %v762
        %v881 = vpop.f32.mrf.mxu0
        %v882 = vadd.f32 0.0, %v881
        %v883 = vpop.f32.mrf.mxu0
        %v884 = vpop.f32.mrf.mxu0
        %v885 = vpop.f32.mrf.mxu0
        %886 = vdwg.mxu0
        %v887 = vadd.f32 %v607, %v802
        %v888 = vadd.f32 %v610, %v805
        %v889 = vadd.f32 %v615, %v810
        %v890 = vadd.f32 %v618, %v813
        %v891 = vadd.f32 %v623, %v818
        %v892 = vadd.f32 %v626, %v821
        %v893 = vadd.f32 %v631, %v826
        %v894 = vadd.f32 %v634, %v829
        %v895 = vadd.f32 %v639, %v834
        %v896 = vadd.f32 %v642, %v837
        %v897 = vadd.f32 %v647, %v842
        %v898 = vadd.f32 %v650, %v845
        %v899 = vadd.f32 %v655, %v850
        %v900 = vadd.f32 %v658, %v853
        %v901 = vadd.f32 %v663, %v858
        %v902 = vadd.f32 %v666, %v861
        %v903 = vadd.f32 %v671, %v866
        %v904 = vadd.f32 %v674, %v869
        %v905 = vadd.f32 %v679, %v874
        %v906 = vadd.f32 %v682, %v877
        %v907 = vadd.f32 %v687, %v882
        %v908 = vld [vmem:[%s195 + $0x4] sm:$0x8]
        %v909 = vld [vmem:[%s195 + $0x8] sm:$0xf]
        %v910 = vld [vmem:[%s195 + $0xc] sm:$0xf]
        %v911 = vld [vmem:[%s195 + $0x10] sm:$0xf]
        %v912 = vld [vmem:[%s195 + $0x14] sm:$0xf]
        %v913 = vld [vmem:[%s195 + $0x18] sm:$0xf]
        %v914 = vld [vmem:[%s195 + $0x1c] sm:$0xf]
        %v915 = vld [vmem:[%s195 + $0x20] sm:$0xf]
        %v916 = vld [vmem:[%s195 + $0x24] sm:$0xf]
        %v917 = vld [vmem:[%s195 + $0x28] sm:$0xf]
        %v918 = vld [vmem:[%s195 + $0x2c] sm:$0xf]
        %v919 = vld [vmem:[%s195 + $0x30] sm:$0xf]
        %v920 = vld [vmem:[%s195 + $0x34] sm:$0xf]
        %v921 = vld [vmem:[%s195 + $0x38] sm:$0xf]
        %v922 = vld [vmem:[%s195 + $0x3c] sm:$0xf]
        %v923 = vld [vmem:[%s195 + $0x40] sm:$0xf]
        %v924 = vld [vmem:[%s195 + $0x44] sm:$0xf]
        %v925 = vld [vmem:[%s195 + $0x48] sm:$0xf]
        %v926 = vld [vmem:[%s195 + $0x4c] sm:$0xf]
        %v927 = vld [vmem:[%s195 + $0x50] sm:$0xf]
        %v928 = vld [vmem:[%s195 + $0x54] sm:$0xf]
        %v929 = vld [vmem:[%s195 + $0x58] sm:$0x7]
        %s930 = scalar_lea.vmem %s1, 36
        %v931 = vld [vmem:[%s930] sm:$0xf]
        %v932 = vld [vmem:[%s930 + $0x4] sm:$0xf]
        %v933 = vld [vmem:[%s930 + $0x8] sm:$0xf]
        %v956 = vunpack.c.l.b16 %v908
        %v957 = vunpack.c.l.b16 %v909
        %v958 = vunpack.c.l.b16 %v910
        %v959 = vunpack.c.l.b16 %v911
        %v960 = vunpack.c.l.b16 %v912
        %v961 = vunpack.c.l.b16 %v913
        %v962 = vunpack.c.l.b16 %v914
        %v963 = vunpack.c.l.b16 %v915
        %v964 = vunpack.c.l.b16 %v916
        %v965 = vunpack.c.l.b16 %v917
        %v966 = vunpack.c.l.b16 %v918
        %v967 = vunpack.c.l.b16 %v919
        %v968 = vunpack.c.l.b16 %v920
        %v969 = vunpack.c.l.b16 %v921
        %v970 = vunpack.c.l.b16 %v922
        %v971 = vunpack.c.l.b16 %v923
        %v972 = vunpack.c.l.b16 %v924
        %v973 = vunpack.c.l.b16 %v925
        %v974 = vunpack.c.l.b16 %v926
        %v975 = vunpack.c.l.b16 %v927
        %v976 = vunpack.c.l.b16 %v928
        %v977 = vunpack.c.l.b16 %v929
        %v978 = vpack.c.b16 %v957, %v956
        %v979 = vpack.c.b16 %v959, %v958
        %v980 = vpack.c.b16 %v961, %v960
        %v981 = vpack.c.b16 %v963, %v962
        %v982 = vpack.c.b16 %v965, %v964
        %v983 = vpack.c.b16 %v967, %v966
        %v984 = vpack.c.b16 %v969, %v968
        %v985 = vpack.c.b16 %v971, %v970
        %v986 = vpack.c.b16 %v973, %v972
        %v987 = vpack.c.b16 %v975, %v974
        %v988 = vpack.c.b16 %v977, %v976
        %vm989 = vcmask 1044480
        %v990 = vrot.slane %v978, 3
        %v991 = vrot.slane %v979, 3
        %v992 = vsel %vm989, %v990, %v991
        %v993 = vrot.slane %v980, 3
        %v994 = vsel %vm989, %v991, %v993
        %v995 = vrot.slane %v981, 3
        %v996 = vsel %vm989, %v993, %v995
        %v997 = vrot.slane %v982, 3
        %v998 = vsel %vm989, %v995, %v997
        %v999 = vrot.slane %v983, 3
        %v1000 = vsel %vm989, %v997, %v999
        %v1001 = vrot.slane %v984, 3
        %v1002 = vsel %vm989, %v999, %v1001
        %v1003 = vrot.slane %v985, 3
        %v1004 = vsel %vm989, %v1001, %v1003
        %v1005 = vrot.slane %v986, 3
        %v1006 = vsel %vm989, %v1003, %v1005
        %v1007 = vrot.slane %v987, 3
        %v1008 = vsel %vm989, %v1005, %v1007
        %v1009 = vrot.slane %v988, 3
        %v1010 = vsel %vm989, %v1007, %v1009
        %v1014 = vunpack.c.l.b16 %v931
        %v1015 = vunpack.c.l.b16 %v932
        %v1016 = vunpack.c.l.b16 %v933
        %v1017 = vpack.c.b16 %v1015, %v1014
        %v1018 = vpack.c.b16 %v1016, %v1016
        %v1021 = vsel %vm378, %v992, 0
        %v1024 = vsel %vm378, %v994, 0
        %v1027 = vsel %vm378, %v996, 0
        %v1030 = vsel %vm378, %v998, 0
        %v1033 = vsel %vm378, %v1000, 0
        %v1036 = vsel %vm378, %v1002, 0
        %v1039 = vsel %vm378, %v1004, 0
        %v1042 = vsel %vm378, %v1006, 0
        %v1045 = vsel %vm378, %v1008, 0
        %v1048 = vsel %vm378, %v1010, 0
        %v1051 = vsel %vm378, %v1009, 0
        %v1054 = vsel %vm412, %v1018, 0
        %1056 = vmatprep.subr.bf16.mxu0 0
        %1057 = vmatpush1.bf16.msra.mxu0 0
        %1058 = vmatprep.subr.bf16.mxu0 0
        %1059 = vmatpush1.bf16.msra.mxu0 0
        %1060 = vmatprep.subr.bf16.mxu0 0
        %1061 = vmatpush1.bf16.msra.mxu0 0
        %1062 = vmatprep.subr.bf16.mxu0 0
        %1063 = vmatpush1.bf16.msra.mxu0 0
        %1064 = vmatprep.subr.bf16.mxu0 0
        %1065 = vmatpush1.bf16.msra.mxu0 0
        %1066 = vmatprep.subr.bf16.mxu0 0
        %1067 = vmatpush1.bf16.msra.mxu0 0
        %1068 = vmatprep.subr.bf16.mxu0 0
        %1069 = vmatpush1.bf16.msra.mxu0 %v1054
        %1070 = vmatprep.subr.bf16.mxu0 0
        %1071 = vmatpush1.bf16.msra.mxu0 %v1017
        %1072 = vmatprep.subr.bf16.mxu0 0
        %1073 = vmatpush2.bf16.msra.mxu0 0
        %1074 = vmatprep.subr.bf16.mxu0 0
        %1075 = vmatpush2.bf16.msra.mxu0 0
        %1076 = vmatprep.subr.bf16.mxu0 0
        %1077 = vmatpush2.bf16.msra.mxu0 0
        %1078 = vmatprep.subr.bf16.mxu0 0
        %1079 = vmatpush2.bf16.msra.mxu0 0
        %1080 = vmatprep.subr.bf16.mxu0 0
        %1081 = vmatpush2.bf16.msra.mxu0 0
        %1082 = vmatprep.subr.bf16.mxu0 0
        %1083 = vmatpush2.bf16.msra.mxu0 0
        %1084 = vmatprep.subr.bf16.mxu0 0
        %1085 = vmatpush2.bf16.msra.mxu0 0
        %1086 = vmatprep.subr.bf16.mxu0 0
        %1087 = vmatpush2.bf16.msra.mxu0 0
        %1088 = vmatprep.mubr.bf16.mxu0 0
        %1089 = vmatmul.mubr.bf16.gmra.mxu0 %v1021
        %v1090 = vpop.f32.mrf.mxu0
        %v1091 = vadd.f32 0.0, %v1090
        %v1092 = vpop.f32.mrf.mxu0
        %v1093 = vpop.f32.mrf.mxu0
        %v1094 = vadd.f32 0.0, %v1093
        %v1095 = vpop.f32.mrf.mxu0
        %1096 = vmatprep.mubr.bf16.mxu0 0
        %1097 = vmatmul.mubr.bf16.gmra.mxu0 %v1024
        %v1098 = vpop.f32.mrf.mxu0
        %v1099 = vadd.f32 0.0, %v1098
        %v1100 = vpop.f32.mrf.mxu0
        %v1101 = vpop.f32.mrf.mxu0
        %v1102 = vadd.f32 0.0, %v1101
        %v1103 = vpop.f32.mrf.mxu0
        %1104 = vmatprep.mubr.bf16.mxu0 0
        %1105 = vmatmul.mubr.bf16.gmra.mxu0 %v1027
        %v1106 = vpop.f32.mrf.mxu0
        %v1107 = vadd.f32 0.0, %v1106
        %v1108 = vpop.f32.mrf.mxu0
        %v1109 = vpop.f32.mrf.mxu0
        %v1110 = vadd.f32 0.0, %v1109
        %v1111 = vpop.f32.mrf.mxu0
        %1112 = vmatprep.mubr.bf16.mxu0 0
        %1113 = vmatmul.mubr.bf16.gmra.mxu0 %v1030
        %v1114 = vpop.f32.mrf.mxu0
        %v1115 = vadd.f32 0.0, %v1114
        %v1116 = vpop.f32.mrf.mxu0
        %v1117 = vpop.f32.mrf.mxu0
        %v1118 = vadd.f32 0.0, %v1117
        %v1119 = vpop.f32.mrf.mxu0
        %1120 = vmatprep.mubr.bf16.mxu0 0
        %1121 = vmatmul.mubr.bf16.gmra.mxu0 %v1033
        %v1122 = vpop.f32.mrf.mxu0
        %v1123 = vadd.f32 0.0, %v1122
        %v1124 = vpop.f32.mrf.mxu0
        %v1125 = vpop.f32.mrf.mxu0
        %v1126 = vadd.f32 0.0, %v1125
        %v1127 = vpop.f32.mrf.mxu0
        %1128 = vmatprep.mubr.bf16.mxu0 0
        %1129 = vmatmul.mubr.bf16.gmra.mxu0 %v1036
        %v1130 = vpop.f32.mrf.mxu0
        %v1131 = vadd.f32 0.0, %v1130
        %v1132 = vpop.f32.mrf.mxu0
        %v1133 = vpop.f32.mrf.mxu0
        %v1134 = vadd.f32 0.0, %v1133
        %v1135 = vpop.f32.mrf.mxu0
        %1136 = vmatprep.mubr.bf16.mxu0 0
        %1137 = vmatmul.mubr.bf16.gmra.mxu0 %v1039
        %v1138 = vpop.f32.mrf.mxu0
        %v1139 = vadd.f32 0.0, %v1138
        %v1140 = vpop.f32.mrf.mxu0
        %v1141 = vpop.f32.mrf.mxu0
        %v1142 = vadd.f32 0.0, %v1141
        %v1143 = vpop.f32.mrf.mxu0
        %1144 = vmatprep.mubr.bf16.mxu0 0
        %1145 = vmatmul.mubr.bf16.gmra.mxu0 %v1042
        %v1146 = vpop.f32.mrf.mxu0
        %v1147 = vadd.f32 0.0, %v1146
        %v1148 = vpop.f32.mrf.mxu0
        %v1149 = vpop.f32.mrf.mxu0
        %v1150 = vadd.f32 0.0, %v1149
        %v1151 = vpop.f32.mrf.mxu0
        %1152 = vmatprep.mubr.bf16.mxu0 0
        %1153 = vmatmul.mubr.bf16.gmra.mxu0 %v1045
        %v1154 = vpop.f32.mrf.mxu0
        %v1155 = vadd.f32 0.0, %v1154
        %v1156 = vpop.f32.mrf.mxu0
        %v1157 = vpop.f32.mrf.mxu0
        %v1158 = vadd.f32 0.0, %v1157
        %v1159 = vpop.f32.mrf.mxu0
        %1160 = vmatprep.mubr.bf16.mxu0 0
        %1161 = vmatmul.mubr.bf16.gmra.mxu0 %v1048
        %v1162 = vpop.f32.mrf.mxu0
        %v1163 = vadd.f32 0.0, %v1162
        %v1164 = vpop.f32.mrf.mxu0
        %v1165 = vpop.f32.mrf.mxu0
        %v1166 = vadd.f32 0.0, %v1165
        %v1167 = vpop.f32.mrf.mxu0
        %1168 = vmatprep.mubr.bf16.mxu0 0
        %1169 = vmatmul.mubr.bf16.gmra.mxu0 %v1051
        %v1170 = vpop.f32.mrf.mxu0
        %v1171 = vadd.f32 0.0, %v1170
        %v1172 = vpop.f32.mrf.mxu0
        %v1173 = vpop.f32.mrf.mxu0
        %v1174 = vpop.f32.mrf.mxu0
        %1175 = vdwg.mxu0
        %v1176 = vadd.f32 %v887, %v1091
        %v1177 = vadd.f32 %v888, %v1094
        %v1178 = vadd.f32 %v889, %v1099
        %v1179 = vadd.f32 %v890, %v1102
        %v1180 = vadd.f32 %v891, %v1107
        %v1181 = vadd.f32 %v892, %v1110
        %v1182 = vadd.f32 %v893, %v1115
        %v1183 = vadd.f32 %v894, %v1118
        %v1184 = vadd.f32 %v895, %v1123
        %v1185 = vadd.f32 %v896, %v1126
        %v1186 = vadd.f32 %v897, %v1131
        %v1187 = vadd.f32 %v898, %v1134
        %v1188 = vadd.f32 %v899, %v1139
        %v1189 = vadd.f32 %v900, %v1142
        %v1190 = vadd.f32 %v901, %v1147
        %v1191 = vadd.f32 %v902, %v1150
        %v1192 = vadd.f32 %v903, %v1155
        %v1193 = vadd.f32 %v904, %v1158
        %v1194 = vadd.f32 %v905, %v1163
        %v1195 = vadd.f32 %v906, %v1166
        %v1196 = vadd.f32 %v907, %v1171
        %v1197 = vld [vmem:[%s195 + $0x58] sm:$0xf]
        %s1198 = scalar_lea.vmem %s1, 48
        %v1199 = vld [vmem:[%s1198] sm:$0xf]
        %v1200 = vld [vmem:[%s1198 + $0x4] sm:$0xf]
        %v1201 = vld [vmem:[%s1198 + $0x8] sm:$0xf]
        %v1203 = vunpack.c.l.b16 %v1197
        %v1204 = vpack.c.b16 %v1203, %v976
        %vm1205 = vsmask.f32 4352
        %v1207 = vshrl.u32 %v978, 16
        %v1209 = vrot.slane %v1207, 3
        %v1210 = vshll.u32 %v978, 16
        %v1212 = vrot.slane %v1210, 4
        %v1213 = vor.u32 %v1209, %v1212
        %v1215 = vshrl.u32 %v979, 16
        %v1217 = vrot.slane %v1215, 3
        %v1218 = vshll.u32 %v979, 16
        %v1220 = vrot.slane %v1218, 4
        %v1221 = vor.u32 %v1217, %v1220
        %v1222 = vsel %vm1205, %v1213, %v1221
        %v1224 = vshrl.u32 %v980, 16
        %v1226 = vrot.slane %v1224, 3
        %v1227 = vshll.u32 %v980, 16
        %v1229 = vrot.slane %v1227, 4
        %v1230 = vor.u32 %v1226, %v1229
        %v1231 = vsel %vm1205, %v1221, %v1230
        %v1233 = vshrl.u32 %v981, 16
        %v1235 = vrot.slane %v1233, 3
        %v1236 = vshll.u32 %v981, 16
        %v1238 = vrot.slane %v1236, 4
        %v1239 = vor.u32 %v1235, %v1238
        %v1240 = vsel %vm1205, %v1230, %v1239
        %v1242 = vshrl.u32 %v982, 16
        %v1244 = vrot.slane %v1242, 3
        %v1245 = vshll.u32 %v982, 16
        %v1247 = vrot.slane %v1245, 4
        %v1248 = vor.u32 %v1244, %v1247
        %v1249 = vsel %vm1205, %v1239, %v1248
        %v1251 = vshrl.u32 %v983, 16
        %v1253 = vrot.slane %v1251, 3
        %v1254 = vshll.u32 %v983, 16
        %v1256 = vrot.slane %v1254, 4
        %v1257 = vor.u32 %v1253, %v1256
        %v1258 = vsel %vm1205, %v1248, %v1257
        %v1260 = vshrl.u32 %v984, 16
        %v1262 = vrot.slane %v1260, 3
        %v1263 = vshll.u32 %v984, 16
        %v1265 = vrot.slane %v1263, 4
        %v1266 = vor.u32 %v1262, %v1265
        %v1267 = vsel %vm1205, %v1257, %v1266
        %v1269 = vshrl.u32 %v985, 16
        %v1271 = vrot.slane %v1269, 3
        %v1272 = vshll.u32 %v985, 16
        %v1274 = vrot.slane %v1272, 4
        %v1275 = vor.u32 %v1271, %v1274
        %v1276 = vsel %vm1205, %v1266, %v1275
        %v1278 = vshrl.u32 %v986, 16
        %v1280 = vrot.slane %v1278, 3
        %v1281 = vshll.u32 %v986, 16
        %v1283 = vrot.slane %v1281, 4
        %v1284 = vor.u32 %v1280, %v1283
        %v1285 = vsel %vm1205, %v1275, %v1284
        %v1287 = vshrl.u32 %v987, 16
        %v1289 = vrot.slane %v1287, 3
        %v1290 = vshll.u32 %v987, 16
        %v1292 = vrot.slane %v1290, 4
        %v1293 = vor.u32 %v1289, %v1292
        %v1294 = vsel %vm1205, %v1284, %v1293
        %v1296 = vshrl.u32 %v1204, 16
        %v1298 = vrot.slane %v1296, 3
        %v1299 = vshll.u32 %v1204, 16
        %v1301 = vrot.slane %v1299, 4
        %v1302 = vor.u32 %v1298, %v1301
        %v1303 = vsel %vm1205, %v1293, %v1302
        %v1307 = vunpack.c.l.b16 %v1199
        %v1308 = vunpack.c.l.b16 %v1200
        %v1309 = vunpack.c.l.b16 %v1201
        %v1310 = vpack.c.b16 %v1308, %v1307
        %v1311 = vpack.c.b16 %v1309, %v1309
        %v1314 = vsel %vm378, %v1222, 0
        %v1317 = vsel %vm378, %v1231, 0
        %v1320 = vsel %vm378, %v1240, 0
        %v1323 = vsel %vm378, %v1249, 0
        %v1326 = vsel %vm378, %v1258, 0
        %v1329 = vsel %vm378, %v1267, 0
        %v1332 = vsel %vm378, %v1276, 0
        %v1335 = vsel %vm378, %v1285, 0
        %v1338 = vsel %vm378, %v1294, 0
        %v1341 = vsel %vm378, %v1303, 0
        %v1344 = vsel %vm378, %v1302, 0
        %v1347 = vsel %vm412, %v1311, 0
        %1349 = vmatprep.subr.bf16.mxu0 0
        %1350 = vmatpush1.bf16.msra.mxu0 0
        %1351 = vmatprep.subr.bf16.mxu0 0
        %1352 = vmatpush1.bf16.msra.mxu0 0
        %1353 = vmatprep.subr.bf16.mxu0 0
        %1354 = vmatpush1.bf16.msra.mxu0 0
        %1355 = vmatprep.subr.bf16.mxu0 0
        %1356 = vmatpush1.bf16.msra.mxu0 0
        %1357 = vmatprep.subr.bf16.mxu0 0
        %1358 = vmatpush1.bf16.msra.mxu0 0
        %1359 = vmatprep.subr.bf16.mxu0 0
        %1360 = vmatpush1.bf16.msra.mxu0 0
        %1361 = vmatprep.subr.bf16.mxu0 0
        %1362 = vmatpush1.bf16.msra.mxu0 %v1347
        %1363 = vmatprep.subr.bf16.mxu0 0
        %1364 = vmatpush1.bf16.msra.mxu0 %v1310
        %1365 = vmatprep.subr.bf16.mxu0 0
        %1366 = vmatpush2.bf16.msra.mxu0 0
        %1367 = vmatprep.subr.bf16.mxu0 0
        %1368 = vmatpush2.bf16.msra.mxu0 0
        %1369 = vmatprep.subr.bf16.mxu0 0
        %1370 = vmatpush2.bf16.msra.mxu0 0
        %1371 = vmatprep.subr.bf16.mxu0 0
        %1372 = vmatpush2.bf16.msra.mxu0 0
        %1373 = vmatprep.subr.bf16.mxu0 0
        %1374 = vmatpush2.bf16.msra.mxu0 0
        %1375 = vmatprep.subr.bf16.mxu0 0
        %1376 = vmatpush2.bf16.msra.mxu0 0
        %1377 = vmatprep.subr.bf16.mxu0 0
        %1378 = vmatpush2.bf16.msra.mxu0 0
        %1379 = vmatprep.subr.bf16.mxu0 0
        %1380 = vmatpush2.bf16.msra.mxu0 0
        %1381 = vmatprep.mubr.bf16.mxu0 0
        %1382 = vmatmul.mubr.bf16.gmra.mxu0 %v1314
        %v1383 = vpop.f32.mrf.mxu0
        %v1384 = vadd.f32 0.0, %v1383
        %v1385 = vpop.f32.mrf.mxu0
        %v1386 = vpop.f32.mrf.mxu0
        %v1387 = vadd.f32 0.0, %v1386
        %v1388 = vpop.f32.mrf.mxu0
        %1389 = vmatprep.mubr.bf16.mxu0 0
        %1390 = vmatmul.mubr.bf16.gmra.mxu0 %v1317
        %v1391 = vpop.f32.mrf.mxu0
        %v1392 = vadd.f32 0.0, %v1391
        %v1393 = vpop.f32.mrf.mxu0
        %v1394 = vpop.f32.mrf.mxu0
        %v1395 = vadd.f32 0.0, %v1394
        %v1396 = vpop.f32.mrf.mxu0
        %1397 = vmatprep.mubr.bf16.mxu0 0
        %1398 = vmatmul.mubr.bf16.gmra.mxu0 %v1320
        %v1399 = vpop.f32.mrf.mxu0
        %v1400 = vadd.f32 0.0, %v1399
        %v1401 = vpop.f32.mrf.mxu0
        %v1402 = vpop.f32.mrf.mxu0
        %v1403 = vadd.f32 0.0, %v1402
        %v1404 = vpop.f32.mrf.mxu0
        %1405 = vmatprep.mubr.bf16.mxu0 0
        %1406 = vmatmul.mubr.bf16.gmra.mxu0 %v1323
        %v1407 = vpop.f32.mrf.mxu0
        %v1408 = vadd.f32 0.0, %v1407
        %v1409 = vpop.f32.mrf.mxu0
        %v1410 = vpop.f32.mrf.mxu0
        %v1411 = vadd.f32 0.0, %v1410
        %v1412 = vpop.f32.mrf.mxu0
        %1413 = vmatprep.mubr.bf16.mxu0 0
        %1414 = vmatmul.mubr.bf16.gmra.mxu0 %v1326
        %v1415 = vpop.f32.mrf.mxu0
        %v1416 = vadd.f32 0.0, %v1415
        %v1417 = vpop.f32.mrf.mxu0
        %v1418 = vpop.f32.mrf.mxu0
        %v1419 = vadd.f32 0.0, %v1418
        %v1420 = vpop.f32.mrf.mxu0
        %1421 = vmatprep.mubr.bf16.mxu0 0
        %1422 = vmatmul.mubr.bf16.gmra.mxu0 %v1329
        %v1423 = vpop.f32.mrf.mxu0
        %v1424 = vadd.f32 0.0, %v1423
        %v1425 = vpop.f32.mrf.mxu0
        %v1426 = vpop.f32.mrf.mxu0
        %v1427 = vadd.f32 0.0, %v1426
        %v1428 = vpop.f32.mrf.mxu0
        %1429 = vmatprep.mubr.bf16.mxu0 0
        %1430 = vmatmul.mubr.bf16.gmra.mxu0 %v1332
        %v1431 = vpop.f32.mrf.mxu0
        %v1432 = vadd.f32 0.0, %v1431
        %v1433 = vpop.f32.mrf.mxu0
        %v1434 = vpop.f32.mrf.mxu0
        %v1435 = vadd.f32 0.0, %v1434
        %v1436 = vpop.f32.mrf.mxu0
        %1437 = vmatprep.mubr.bf16.mxu0 0
        %1438 = vmatmul.mubr.bf16.gmra.mxu0 %v1335
        %v1439 = vpop.f32.mrf.mxu0
        %v1440 = vadd.f32 0.0, %v1439
        %v1441 = vpop.f32.mrf.mxu0
        %v1442 = vpop.f32.mrf.mxu0
        %v1443 = vadd.f32 0.0, %v1442
        %v1444 = vpop.f32.mrf.mxu0
        %1445 = vmatprep.mubr.bf16.mxu0 0
        %1446 = vmatmul.mubr.bf16.gmra.mxu0 %v1338
        %v1447 = vpop.f32.mrf.mxu0
        %v1448 = vadd.f32 0.0, %v1447
        %v1449 = vpop.f32.mrf.mxu0
        %v1450 = vpop.f32.mrf.mxu0
        %v1451 = vadd.f32 0.0, %v1450
        %v1452 = vpop.f32.mrf.mxu0
        %1453 = vmatprep.mubr.bf16.mxu0 0
        %1454 = vmatmul.mubr.bf16.gmra.mxu0 %v1341
        %v1455 = vpop.f32.mrf.mxu0
        %v1456 = vadd.f32 0.0, %v1455
        %v1457 = vpop.f32.mrf.mxu0
        %v1458 = vpop.f32.mrf.mxu0
        %v1459 = vadd.f32 0.0, %v1458
        %v1460 = vpop.f32.mrf.mxu0
        %1461 = vmatprep.mubr.bf16.mxu0 0
        %1462 = vmatmul.mubr.bf16.gmra.mxu0 %v1344
        %v1463 = vpop.f32.mrf.mxu0
        %v1464 = vadd.f32 0.0, %v1463
        %v1465 = vpop.f32.mrf.mxu0
        %v1466 = vpop.f32.mrf.mxu0
        %v1467 = vpop.f32.mrf.mxu0
        %1468 = vdwg.mxu0
        %v1469 = vadd.f32 %v1176, %v1384
        %v1470 = vadd.f32 %v1177, %v1387
        %v1471 = vadd.f32 %v1178, %v1392
        %v1472 = vadd.f32 %v1179, %v1395
        %v1473 = vadd.f32 %v1180, %v1400
        %v1474 = vadd.f32 %v1181, %v1403
        %v1475 = vadd.f32 %v1182, %v1408
        %v1476 = vadd.f32 %v1183, %v1411
        %v1477 = vadd.f32 %v1184, %v1416
        %v1478 = vadd.f32 %v1185, %v1419
        %v1479 = vadd.f32 %v1186, %v1424
        %v1480 = vadd.f32 %v1187, %v1427
        %v1481 = vadd.f32 %v1188, %v1432
        %v1482 = vadd.f32 %v1189, %v1435
        %v1483 = vadd.f32 %v1190, %v1440
        %v1484 = vadd.f32 %v1191, %v1443
        %v1485 = vadd.f32 %v1192, %v1448
        %v1486 = vadd.f32 %v1193, %v1451
        %v1487 = vadd.f32 %v1194, %v1456
        %v1488 = vadd.f32 %v1195, %v1459
        %v1489 = vadd.f32 %v1196, %v1464
        %s1490 = scalar_lea.vmem %s1, 60
        %v1491 = vld [vmem:[%s1490] sm:$0xf]
        %v1492 = vld [vmem:[%s1490 + $0x4] sm:$0xf]
        %v1493 = vld [vmem:[%s1490 + $0x8] sm:$0xf]
        %v1494 = vpack.c.b16 %v958, %v957
        %v1495 = vpack.c.b16 %v960, %v959
        %v1496 = vpack.c.b16 %v962, %v961
        %v1497 = vpack.c.b16 %v964, %v963
        %v1498 = vpack.c.b16 %v966, %v965
        %v1499 = vpack.c.b16 %v968, %v967
        %v1500 = vpack.c.b16 %v970, %v969
        %v1501 = vpack.c.b16 %v972, %v971
        %v1502 = vpack.c.b16 %v974, %v973
        %v1503 = vpack.c.b16 %v976, %v975
        %v1504 = vpack.c.b16 %v1203, %v1203
        %v1508 = vunpack.c.l.b16 %v1491
        %v1509 = vunpack.c.l.b16 %v1492
        %v1510 = vunpack.c.l.b16 %v1493
        %v1511 = vpack.c.b16 %v1509, %v1508
        %v1512 = vpack.c.b16 %v1510, %v1510
        %v1515 = vsel %vm378, %v1494, 0
        %v1518 = vsel %vm378, %v1495, 0
        %v1521 = vsel %vm378, %v1496, 0
        %v1524 = vsel %vm378, %v1497, 0
        %v1527 = vsel %vm378, %v1498, 0
        %v1530 = vsel %vm378, %v1499, 0
        %v1533 = vsel %vm378, %v1500, 0
        %v1536 = vsel %vm378, %v1501, 0
        %v1539 = vsel %vm378, %v1502, 0
        %v1542 = vsel %vm378, %v1503, 0
        %v1545 = vsel %vm378, %v1504, 0
        %v1548 = vsel %vm412, %v1512, 0
        %1550 = vmatprep.subr.bf16.mxu0 0
        %1551 = vmatpush1.bf16.msra.mxu0 0
        %1552 = vmatprep.subr.bf16.mxu0 0
        %1553 = vmatpush1.bf16.msra.mxu0 0
        %1554 = vmatprep.subr.bf16.mxu0 0
        %1555 = vmatpush1.bf16.msra.mxu0 0
        %1556 = vmatprep.subr.bf16.mxu0 0
        %1557 = vmatpush1.bf16.msra.mxu0 0
        %1558 = vmatprep.subr.bf16.mxu0 0
        %1559 = vmatpush1.bf16.msra.mxu0 0
        %1560 = vmatprep.subr.bf16.mxu0 0
        %1561 = vmatpush1.bf16.msra.mxu0 0
        %1562 = vmatprep.subr.bf16.mxu0 0
        %1563 = vmatpush1.bf16.msra.mxu0 %v1548
        %1564 = vmatprep.subr.bf16.mxu0 0
        %1565 = vmatpush1.bf16.msra.mxu0 %v1511
        %1566 = vmatprep.subr.bf16.mxu0 0
        %1567 = vmatpush2.bf16.msra.mxu0 0
        %1568 = vmatprep.subr.bf16.mxu0 0
        %1569 = vmatpush2.bf16.msra.mxu0 0
        %1570 = vmatprep.subr.bf16.mxu0 0
        %1571 = vmatpush2.bf16.msra.mxu0 0
        %1572 = vmatprep.subr.bf16.mxu0 0
        %1573 = vmatpush2.bf16.msra.mxu0 0
        %1574 = vmatprep.subr.bf16.mxu0 0
        %1575 = vmatpush2.bf16.msra.mxu0 0
        %1576 = vmatprep.subr.bf16.mxu0 0
        %1577 = vmatpush2.bf16.msra.mxu0 0
        %1578 = vmatprep.subr.bf16.mxu0 0
        %1579 = vmatpush2.bf16.msra.mxu0 0
        %1580 = vmatprep.subr.bf16.mxu0 0
        %1581 = vmatpush2.bf16.msra.mxu0 0
        %1582 = vmatprep.mubr.bf16.mxu0 0
        %1583 = vmatmul.mubr.bf16.gmra.mxu0 %v1515
        %v1584 = vpop.f32.mrf.mxu0
        %v1585 = vadd.f32 0.0, %v1584
        %v1586 = vpop.f32.mrf.mxu0
        %v1587 = vpop.f32.mrf.mxu0
        %v1588 = vadd.f32 0.0, %v1587
        %v1589 = vpop.f32.mrf.mxu0
        %1590 = vmatprep.mubr.bf16.mxu0 0
        %1591 = vmatmul.mubr.bf16.gmra.mxu0 %v1518
        %v1592 = vpop.f32.mrf.mxu0
        %v1593 = vadd.f32 0.0, %v1592
        %v1594 = vpop.f32.mrf.mxu0
        %v1595 = vpop.f32.mrf.mxu0
        %v1596 = vadd.f32 0.0, %v1595
        %v1597 = vpop.f32.mrf.mxu0
        %1598 = vmatprep.mubr.bf16.mxu0 0
        %1599 = vmatmul.mubr.bf16.gmra.mxu0 %v1521
        %v1600 = vpop.f32.mrf.mxu0
        %v1601 = vadd.f32 0.0, %v1600
        %v1602 = vpop.f32.mrf.mxu0
        %v1603 = vpop.f32.mrf.mxu0
        %v1604 = vadd.f32 0.0, %v1603
        %v1605 = vpop.f32.mrf.mxu0
        %1606 = vmatprep.mubr.bf16.mxu0 0
        %1607 = vmatmul.mubr.bf16.gmra.mxu0 %v1524
        %v1608 = vpop.f32.mrf.mxu0
        %v1609 = vadd.f32 0.0, %v1608
        %v1610 = vpop.f32.mrf.mxu0
        %v1611 = vpop.f32.mrf.mxu0
        %v1612 = vadd.f32 0.0, %v1611
        %v1613 = vpop.f32.mrf.mxu0
        %1614 = vmatprep.mubr.bf16.mxu0 0
        %1615 = vmatmul.mubr.bf16.gmra.mxu0 %v1527
        %v1616 = vpop.f32.mrf.mxu0
        %v1617 = vadd.f32 0.0, %v1616
        %v1618 = vpop.f32.mrf.mxu0
        %v1619 = vpop.f32.mrf.mxu0
        %v1620 = vadd.f32 0.0, %v1619
        %v1621 = vpop.f32.mrf.mxu0
        %1622 = vmatprep.mubr.bf16.mxu0 0
        %1623 = vmatmul.mubr.bf16.gmra.mxu0 %v1530
        %v1624 = vpop.f32.mrf.mxu0
        %v1625 = vadd.f32 0.0, %v1624
        %v1626 = vpop.f32.mrf.mxu0
        %v1627 = vpop.f32.mrf.mxu0
        %v1628 = vadd.f32 0.0, %v1627
        %v1629 = vpop.f32.mrf.mxu0
        %1630 = vmatprep.mubr.bf16.mxu0 0
        %1631 = vmatmul.mubr.bf16.gmra.mxu0 %v1533
        %v1632 = vpop.f32.mrf.mxu0
        %v1633 = vadd.f32 0.0, %v1632
        %v1634 = vpop.f32.mrf.mxu0
        %v1635 = vpop.f32.mrf.mxu0
        %v1636 = vadd.f32 0.0, %v1635
        %v1637 = vpop.f32.mrf.mxu0
        %1638 = vmatprep.mubr.bf16.mxu0 0
        %1639 = vmatmul.mubr.bf16.gmra.mxu0 %v1536
        %v1640 = vpop.f32.mrf.mxu0
        %v1641 = vadd.f32 0.0, %v1640
        %v1642 = vpop.f32.mrf.mxu0
        %v1643 = vpop.f32.mrf.mxu0
        %v1644 = vadd.f32 0.0, %v1643
        %v1645 = vpop.f32.mrf.mxu0
        %1646 = vmatprep.mubr.bf16.mxu0 0
        %1647 = vmatmul.mubr.bf16.gmra.mxu0 %v1539
        %v1648 = vpop.f32.mrf.mxu0
        %v1649 = vadd.f32 0.0, %v1648
        %v1650 = vpop.f32.mrf.mxu0
        %v1651 = vpop.f32.mrf.mxu0
        %v1652 = vadd.f32 0.0, %v1651
        %v1653 = vpop.f32.mrf.mxu0
        %1654 = vmatprep.mubr.bf16.mxu0 0
        %1655 = vmatmul.mubr.bf16.gmra.mxu0 %v1542
        %v1656 = vpop.f32.mrf.mxu0
        %v1657 = vadd.f32 0.0, %v1656
        %v1658 = vpop.f32.mrf.mxu0
        %v1659 = vpop.f32.mrf.mxu0
        %v1660 = vadd.f32 0.0, %v1659
        %v1661 = vpop.f32.mrf.mxu0
        %1662 = vmatprep.mubr.bf16.mxu0 0
        %1663 = vmatmul.mubr.bf16.gmra.mxu0 %v1545
        %v1664 = vpop.f32.mrf.mxu0
        %v1665 = vadd.f32 0.0, %v1664
        %v1666 = vpop.f32.mrf.mxu0
        %v1667 = vpop.f32.mrf.mxu0
        %v1668 = vpop.f32.mrf.mxu0
        %1669 = vdwg.mxu0
        %v1670 = vadd.f32 %v1469, %v1585
        %v1671 = vadd.f32 %v1470, %v1588
        %v1672 = vadd.f32 %v1471, %v1593
        %v1673 = vadd.f32 %v1472, %v1596
        %v1674 = vadd.f32 %v1473, %v1601
        %v1675 = vadd.f32 %v1474, %v1604
        %v1676 = vadd.f32 %v1475, %v1609
        %v1677 = vadd.f32 %v1476, %v1612
        %v1678 = vadd.f32 %v1477, %v1617
        %v1679 = vadd.f32 %v1478, %v1620
        %v1680 = vadd.f32 %v1479, %v1625
        %v1681 = vadd.f32 %v1480, %v1628
        %v1682 = vadd.f32 %v1481, %v1633
        %v1683 = vadd.f32 %v1482, %v1636
        %v1684 = vadd.f32 %v1483, %v1641
        %v1685 = vadd.f32 %v1484, %v1644
        %v1686 = vadd.f32 %v1485, %v1649
        %v1687 = vadd.f32 %v1486, %v1652
        %v1688 = vadd.f32 %v1487, %v1657
        %v1689 = vadd.f32 %v1488, %v1660
        %v1690 = vadd.f32 %v1489, %v1665
        %v1691 = vld [vmem:[%s195 + $0xc] sm:$0xc]
        %v1692 = vld [vmem:[%s195 + $0x10] sm:$0xf]
        %v1693 = vld [vmem:[%s195 + $0x14] sm:$0xf]
        %v1694 = vld [vmem:[%s195 + $0x18] sm:$0xf]
        %v1695 = vld [vmem:[%s195 + $0x1c] sm:$0xf]
        %v1696 = vld [vmem:[%s195 + $0x20] sm:$0xf]
        %v1697 = vld [vmem:[%s195 + $0x24] sm:$0xf]
        %v1698 = vld [vmem:[%s195 + $0x28] sm:$0xf]
        %v1699 = vld [vmem:[%s195 + $0x2c] sm:$0xf]
        %v1700 = vld [vmem:[%s195 + $0x30] sm:$0xf]
        %v1701 = vld [vmem:[%s195 + $0x34] sm:$0xf]
        %v1702 = vld [vmem:[%s195 + $0x38] sm:$0xf]
        %v1703 = vld [vmem:[%s195 + $0x3c] sm:$0xf]
        %v1704 = vld [vmem:[%s195 + $0x40] sm:$0xf]
        %v1705 = vld [vmem:[%s195 + $0x44] sm:$0xf]
        %v1706 = vld [vmem:[%s195 + $0x48] sm:$0xf]
        %v1707 = vld [vmem:[%s195 + $0x4c] sm:$0xf]
        %v1708 = vld [vmem:[%s195 + $0x50] sm:$0xf]
        %v1709 = vld [vmem:[%s195 + $0x54] sm:$0xf]
        %v1710 = vld [vmem:[%s195 + $0x58] sm:$0xf]
        %v1711 = vld [vmem:[%s195 + $0x5c] sm:$0xf]
        %v1712 = vld [vmem:[%s195 + $0x60] sm:$0x3]
        %s1713 = scalar_lea.vmem %s1, 72
        %v1714 = vld [vmem:[%s1713] sm:$0xf]
        %v1715 = vld [vmem:[%s1713 + $0x4] sm:$0xf]
        %v1716 = vld [vmem:[%s1713 + $0x8] sm:$0xf]
        %v1739 = vunpack.c.l.b16 %v1691
        %v1740 = vunpack.c.l.b16 %v1692
        %v1741 = vunpack.c.l.b16 %v1693
        %v1742 = vunpack.c.l.b16 %v1694
        %v1743 = vunpack.c.l.b16 %v1695
        %v1744 = vunpack.c.l.b16 %v1696
        %v1745 = vunpack.c.l.b16 %v1697
        %v1746 = vunpack.c.l.b16 %v1698
        %v1747 = vunpack.c.l.b16 %v1699
        %v1748 = vunpack.c.l.b16 %v1700
        %v1749 = vunpack.c.l.b16 %v1701
        %v1750 = vunpack.c.l.b16 %v1702
        %v1751 = vunpack.c.l.b16 %v1703
        %v1752 = vunpack.c.l.b16 %v1704
        %v1753 = vunpack.c.l.b16 %v1705
        %v1754 = vunpack.c.l.b16 %v1706
        %v1755 = vunpack.c.l.b16 %v1707
        %v1756 = vunpack.c.l.b16 %v1708
        %v1757 = vunpack.c.l.b16 %v1709
        %v1758 = vunpack.c.l.b16 %v1710
        %v1759 = vunpack.c.l.b16 %v1711
        %v1760 = vunpack.c.l.b16 %v1712
        %v1761 = vpack.c.b16 %v1740, %v1739
        %v1762 = vpack.c.b16 %v1742, %v1741
        %v1763 = vpack.c.b16 %v1744, %v1743
        %v1764 = vpack.c.b16 %v1746, %v1745
        %v1765 = vpack.c.b16 %v1748, %v1747
        %v1766 = vpack.c.b16 %v1750, %v1749
        %v1767 = vpack.c.b16 %v1752, %v1751
        %v1768 = vpack.c.b16 %v1754, %v1753
        %v1769 = vpack.c.b16 %v1756, %v1755
        %v1770 = vpack.c.b16 %v1758, %v1757
        %v1771 = vpack.c.b16 %v1760, %v1759
        %vm1772 = vcmask 1045504
        %v1773 = vrot.slane %v1761, 2
        %v1774 = vrot.slane %v1762, 2
        %v1775 = vsel %vm1772, %v1773, %v1774
        %v1776 = vrot.slane %v1763, 2
        %v1777 = vsel %vm1772, %v1774, %v1776
        %v1778 = vrot.slane %v1764, 2
        %v1779 = vsel %vm1772, %v1776, %v1778
        %v1780 = vrot.slane %v1765, 2
        %v1781 = vsel %vm1772, %v1778, %v1780
        %v1782 = vrot.slane %v1766, 2
        %v1783 = vsel %vm1772, %v1780, %v1782
        %v1784 = vrot.slane %v1767, 2
        %v1785 = vsel %vm1772, %v1782, %v1784
        %v1786 = vrot.slane %v1768, 2
        %v1787 = vsel %vm1772, %v1784, %v1786
        %v1788 = vrot.slane %v1769, 2
        %v1789 = vsel %vm1772, %v1786, %v1788
        %v1790 = vrot.slane %v1770, 2
        %v1791 = vsel %vm1772, %v1788, %v1790
        %v1792 = vrot.slane %v1771, 2
        %v1793 = vsel %vm1772, %v1790, %v1792
        %v1797 = vunpack.c.l.b16 %v1714
        %v1798 = vunpack.c.l.b16 %v1715
        %v1799 = vunpack.c.l.b16 %v1716
        %v1800 = vpack.c.b16 %v1798, %v1797
        %v1801 = vpack.c.b16 %v1799, %v1799
        %v1804 = vsel %vm378, %v1775, 0
        %v1807 = vsel %vm378, %v1777, 0
        %v1810 = vsel %vm378, %v1779, 0
        %v1813 = vsel %vm378, %v1781, 0
        %v1816 = vsel %vm378, %v1783, 0
        %v1819 = vsel %vm378, %v1785, 0
        %v1822 = vsel %vm378, %v1787, 0
        %v1825 = vsel %vm378, %v1789, 0
        %v1828 = vsel %vm378, %v1791, 0
        %v1831 = vsel %vm378, %v1793, 0
        %v1834 = vsel %vm378, %v1792, 0
        %v1837 = vsel %vm412, %v1801, 0
        %1839 = vmatprep.subr.bf16.mxu0 0
        %1840 = vmatpush1.bf16.msra.mxu0 0
        %1841 = vmatprep.subr.bf16.mxu0 0
        %1842 = vmatpush1.bf16.msra.mxu0 0
        %1843 = vmatprep.subr.bf16.mxu0 0
        %1844 = vmatpush1.bf16.msra.mxu0 0
        %1845 = vmatprep.subr.bf16.mxu0 0
        %1846 = vmatpush1.bf16.msra.mxu0 0
        %1847 = vmatprep.subr.bf16.mxu0 0
        %1848 = vmatpush1.bf16.msra.mxu0 0
        %1849 = vmatprep.subr.bf16.mxu0 0
        %1850 = vmatpush1.bf16.msra.mxu0 0
        %1851 = vmatprep.subr.bf16.mxu0 0
        %1852 = vmatpush1.bf16.msra.mxu0 %v1837
        %1853 = vmatprep.subr.bf16.mxu0 0
        %1854 = vmatpush1.bf16.msra.mxu0 %v1800
        %1855 = vmatprep.subr.bf16.mxu0 0
        %1856 = vmatpush2.bf16.msra.mxu0 0
        %1857 = vmatprep.subr.bf16.mxu0 0
        %1858 = vmatpush2.bf16.msra.mxu0 0
        %1859 = vmatprep.subr.bf16.mxu0 0
        %1860 = vmatpush2.bf16.msra.mxu0 0
        %1861 = vmatprep.subr.bf16.mxu0 0
        %1862 = vmatpush2.bf16.msra.mxu0 0
        %1863 = vmatprep.subr.bf16.mxu0 0
        %1864 = vmatpush2.bf16.msra.mxu0 0
        %1865 = vmatprep.subr.bf16.mxu0 0
        %1866 = vmatpush2.bf16.msra.mxu0 0
        %1867 = vmatprep.subr.bf16.mxu0 0
        %1868 = vmatpush2.bf16.msra.mxu0 0
        %1869 = vmatprep.subr.bf16.mxu0 0
        %1870 = vmatpush2.bf16.msra.mxu0 0
        %1871 = vmatprep.mubr.bf16.mxu0 0
        %1872 = vmatmul.mubr.bf16.gmra.mxu0 %v1804
        %v1873 = vpop.f32.mrf.mxu0
        %v1874 = vadd.f32 0.0, %v1873
        %v1875 = vpop.f32.mrf.mxu0
        %v1876 = vpop.f32.mrf.mxu0
        %v1877 = vadd.f32 0.0, %v1876
        %v1878 = vpop.f32.mrf.mxu0
        %1879 = vmatprep.mubr.bf16.mxu0 0
        %1880 = vmatmul.mubr.bf16.gmra.mxu0 %v1807
        %v1881 = vpop.f32.mrf.mxu0
        %v1882 = vadd.f32 0.0, %v1881
        %v1883 = vpop.f32.mrf.mxu0
        %v1884 = vpop.f32.mrf.mxu0
        %v1885 = vadd.f32 0.0, %v1884
        %v1886 = vpop.f32.mrf.mxu0
        %1887 = vmatprep.mubr.bf16.mxu0 0
        %1888 = vmatmul.mubr.bf16.gmra.mxu0 %v1810
        %v1889 = vpop.f32.mrf.mxu0
        %v1890 = vadd.f32 0.0, %v1889
        %v1891 = vpop.f32.mrf.mxu0
        %v1892 = vpop.f32.mrf.mxu0
        %v1893 = vadd.f32 0.0, %v1892
        %v1894 = vpop.f32.mrf.mxu0
        %1895 = vmatprep.mubr.bf16.mxu0 0
        %1896 = vmatmul.mubr.bf16.gmra.mxu0 %v1813
        %v1897 = vpop.f32.mrf.mxu0
        %v1898 = vadd.f32 0.0, %v1897
        %v1899 = vpop.f32.mrf.mxu0
        %v1900 = vpop.f32.mrf.mxu0
        %v1901 = vadd.f32 0.0, %v1900
        %v1902 = vpop.f32.mrf.mxu0
        %1903 = vmatprep.mubr.bf16.mxu0 0
        %1904 = vmatmul.mubr.bf16.gmra.mxu0 %v1816
        %v1905 = vpop.f32.mrf.mxu0
        %v1906 = vadd.f32 0.0, %v1905
        %v1907 = vpop.f32.mrf.mxu0
        %v1908 = vpop.f32.mrf.mxu0
        %v1909 = vadd.f32 0.0, %v1908
        %v1910 = vpop.f32.mrf.mxu0
        %1911 = vmatprep.mubr.bf16.mxu0 0
        %1912 = vmatmul.mubr.bf16.gmra.mxu0 %v1819
        %v1913 = vpop.f32.mrf.mxu0
        %v1914 = vadd.f32 0.0, %v1913
        %v1915 = vpop.f32.mrf.mxu0
        %v1916 = vpop.f32.mrf.mxu0
        %v1917 = vadd.f32 0.0, %v1916
        %v1918 = vpop.f32.mrf.mxu0
        %1919 = vmatprep.mubr.bf16.mxu0 0
        %1920 = vmatmul.mubr.bf16.gmra.mxu0 %v1822
        %v1921 = vpop.f32.mrf.mxu0
        %v1922 = vadd.f32 0.0, %v1921
        %v1923 = vpop.f32.mrf.mxu0
        %v1924 = vpop.f32.mrf.mxu0
        %v1925 = vadd.f32 0.0, %v1924
        %v1926 = vpop.f32.mrf.mxu0
        %1927 = vmatprep.mubr.bf16.mxu0 0
        %1928 = vmatmul.mubr.bf16.gmra.mxu0 %v1825
        %v1929 = vpop.f32.mrf.mxu0
        %v1930 = vadd.f32 0.0, %v1929
        %v1931 = vpop.f32.mrf.mxu0
        %v1932 = vpop.f32.mrf.mxu0
        %v1933 = vadd.f32 0.0, %v1932
        %v1934 = vpop.f32.mrf.mxu0
        %1935 = vmatprep.mubr.bf16.mxu0 0
        %1936 = vmatmul.mubr.bf16.gmra.mxu0 %v1828
        %v1937 = vpop.f32.mrf.mxu0
        %v1938 = vadd.f32 0.0, %v1937
        %v1939 = vpop.f32.mrf.mxu0
        %v1940 = vpop.f32.mrf.mxu0
        %v1941 = vadd.f32 0.0, %v1940
        %v1942 = vpop.f32.mrf.mxu0
        %1943 = vmatprep.mubr.bf16.mxu0 0
        %1944 = vmatmul.mubr.bf16.gmra.mxu0 %v1831
        %v1945 = vpop.f32.mrf.mxu0
        %v1946 = vadd.f32 0.0, %v1945
        %v1947 = vpop.f32.mrf.mxu0
        %v1948 = vpop.f32.mrf.mxu0
        %v1949 = vadd.f32 0.0, %v1948
        %v1950 = vpop.f32.mrf.mxu0
        %1951 = vmatprep.mubr.bf16.mxu0 0
        %1952 = vmatmul.mubr.bf16.gmra.mxu0 %v1834
        %v1953 = vpop.f32.mrf.mxu0
        %v1954 = vadd.f32 0.0, %v1953
        %v1955 = vpop.f32.mrf.mxu0
        %v1956 = vpop.f32.mrf.mxu0
        %v1957 = vpop.f32.mrf.mxu0
        %1958 = vdwg.mxu0
        %v1959 = vadd.f32 %v1670, %v1874
        %v1960 = vadd.f32 %v1671, %v1877
        %v1961 = vadd.f32 %v1672, %v1882
        %v1962 = vadd.f32 %v1673, %v1885
        %v1963 = vadd.f32 %v1674, %v1890
        %v1964 = vadd.f32 %v1675, %v1893
        %v1965 = vadd.f32 %v1676, %v1898
        %v1966 = vadd.f32 %v1677, %v1901
        %v1967 = vadd.f32 %v1678, %v1906
        %v1968 = vadd.f32 %v1679, %v1909
        %v1969 = vadd.f32 %v1680, %v1914
        %v1970 = vadd.f32 %v1681, %v1917
        %v1971 = vadd.f32 %v1682, %v1922
        %v1972 = vadd.f32 %v1683, %v1925
        %v1973 = vadd.f32 %v1684, %v1930
        %v1974 = vadd.f32 %v1685, %v1933
        %v1975 = vadd.f32 %v1686, %v1938
        %v1976 = vadd.f32 %v1687, %v1941
        %v1977 = vadd.f32 %v1688, %v1946
        %v1978 = vadd.f32 %v1689, %v1949
        %v1979 = vadd.f32 %v1690, %v1954
        %v1980 = vld [vmem:[%s195 + $0x60] sm:$0x7]
        %s1981 = scalar_lea.vmem %s1, 84
        %v1982 = vld [vmem:[%s1981] sm:$0xf]
        %v1983 = vld [vmem:[%s1981 + $0x4] sm:$0xf]
        %v1984 = vld [vmem:[%s1981 + $0x8] sm:$0xf]
        %v1986 = vunpack.c.l.b16 %v1980
        %v1987 = vpack.c.b16 %v1986, %v1759
        %vm1988 = vsmask.f32 5376
        %v1990 = vshrl.u32 %v1761, 16
        %v1992 = vrot.slane %v1990, 2
        %v1993 = vshll.u32 %v1761, 16
        %v1995 = vrot.slane %v1993, 3
        %v1996 = vor.u32 %v1992, %v1995
        %v1998 = vshrl.u32 %v1762, 16
        %v2000 = vrot.slane %v1998, 2
        %v2001 = vshll.u32 %v1762, 16
        %v2003 = vrot.slane %v2001, 3
        %v2004 = vor.u32 %v2000, %v2003
        %v2005 = vsel %vm1988, %v1996, %v2004
        %v2007 = vshrl.u32 %v1763, 16
        %v2009 = vrot.slane %v2007, 2
        %v2010 = vshll.u32 %v1763, 16
        %v2012 = vrot.slane %v2010, 3
        %v2013 = vor.u32 %v2009, %v2012
        %v2014 = vsel %vm1988, %v2004, %v2013
        %v2016 = vshrl.u32 %v1764, 16
        %v2018 = vrot.slane %v2016, 2
        %v2019 = vshll.u32 %v1764, 16
        %v2021 = vrot.slane %v2019, 3
        %v2022 = vor.u32 %v2018, %v2021
        %v2023 = vsel %vm1988, %v2013, %v2022
        %v2025 = vshrl.u32 %v1765, 16
        %v2027 = vrot.slane %v2025, 2
        %v2028 = vshll.u32 %v1765, 16
        %v2030 = vrot.slane %v2028, 3
        %v2031 = vor.u32 %v2027, %v2030
        %v2032 = vsel %vm1988, %v2022, %v2031
        %v2034 = vshrl.u32 %v1766, 16
        %v2036 = vrot.slane %v2034, 2
        %v2037 = vshll.u32 %v1766, 16
        %v2039 = vrot.slane %v2037, 3
        %v2040 = vor.u32 %v2036, %v2039
        %v2041 = vsel %vm1988, %v2031, %v2040
        %v2043 = vshrl.u32 %v1767, 16
        %v2045 = vrot.slane %v2043, 2
        %v2046 = vshll.u32 %v1767, 16
        %v2048 = vrot.slane %v2046, 3
        %v2049 = vor.u32 %v2045, %v2048
        %v2050 = vsel %vm1988, %v2040, %v2049
        %v2052 = vshrl.u32 %v1768, 16
        %v2054 = vrot.slane %v2052, 2
        %v2055 = vshll.u32 %v1768, 16
        %v2057 = vrot.slane %v2055, 3
        %v2058 = vor.u32 %v2054, %v2057
        %v2059 = vsel %vm1988, %v2049, %v2058
        %v2061 = vshrl.u32 %v1769, 16
        %v2063 = vrot.slane %v2061, 2
        %v2064 = vshll.u32 %v1769, 16
        %v2066 = vrot.slane %v2064, 3
        %v2067 = vor.u32 %v2063, %v2066
        %v2068 = vsel %vm1988, %v2058, %v2067
        %v2070 = vshrl.u32 %v1770, 16
        %v2072 = vrot.slane %v2070, 2
        %v2073 = vshll.u32 %v1770, 16
        %v2075 = vrot.slane %v2073, 3
        %v2076 = vor.u32 %v2072, %v2075
        %v2077 = vsel %vm1988, %v2067, %v2076
        %v2079 = vshrl.u32 %v1987, 16
        %v2081 = vrot.slane %v2079, 2
        %v2082 = vshll.u32 %v1987, 16
        %v2084 = vrot.slane %v2082, 3
        %v2085 = vor.u32 %v2081, %v2084
        %v2086 = vsel %vm1988, %v2076, %v2085
        %v2090 = vunpack.c.l.b16 %v1982
        %v2091 = vunpack.c.l.b16 %v1983
        %v2092 = vunpack.c.l.b16 %v1984
        %v2093 = vpack.c.b16 %v2091, %v2090
        %v2094 = vpack.c.b16 %v2092, %v2092
        %v2097 = vsel %vm378, %v2005, 0
        %v2100 = vsel %vm378, %v2014, 0
        %v2103 = vsel %vm378, %v2023, 0
        %v2106 = vsel %vm378, %v2032, 0
        %v2109 = vsel %vm378, %v2041, 0
        %v2112 = vsel %vm378, %v2050, 0
        %v2115 = vsel %vm378, %v2059, 0
        %v2118 = vsel %vm378, %v2068, 0
        %v2121 = vsel %vm378, %v2077, 0
        %v2124 = vsel %vm378, %v2086, 0
        %v2127 = vsel %vm378, %v2085, 0
        %v2130 = vsel %vm412, %v2094, 0
        %2132 = vmatprep.subr.bf16.mxu0 0
        %2133 = vmatpush1.bf16.msra.mxu0 0
        %2134 = vmatprep.subr.bf16.mxu0 0
        %2135 = vmatpush1.bf16.msra.mxu0 0
        %2136 = vmatprep.subr.bf16.mxu0 0
        %2137 = vmatpush1.bf16.msra.mxu0 0
        %2138 = vmatprep.subr.bf16.mxu0 0
        %2139 = vmatpush1.bf16.msra.mxu0 0
        %2140 = vmatprep.subr.bf16.mxu0 0
        %2141 = vmatpush1.bf16.msra.mxu0 0
        %2142 = vmatprep.subr.bf16.mxu0 0
        %2143 = vmatpush1.bf16.msra.mxu0 0
        %2144 = vmatprep.subr.bf16.mxu0 0
        %2145 = vmatpush1.bf16.msra.mxu0 %v2130
        %2146 = vmatprep.subr.bf16.mxu0 0
        %2147 = vmatpush1.bf16.msra.mxu0 %v2093
        %2148 = vmatprep.subr.bf16.mxu0 0
        %2149 = vmatpush2.bf16.msra.mxu0 0
        %2150 = vmatprep.subr.bf16.mxu0 0
        %2151 = vmatpush2.bf16.msra.mxu0 0
        %2152 = vmatprep.subr.bf16.mxu0 0
        %2153 = vmatpush2.bf16.msra.mxu0 0
        %2154 = vmatprep.subr.bf16.mxu0 0
        %2155 = vmatpush2.bf16.msra.mxu0 0
        %2156 = vmatprep.subr.bf16.mxu0 0
        %2157 = vmatpush2.bf16.msra.mxu0 0
        %2158 = vmatprep.subr.bf16.mxu0 0
        %2159 = vmatpush2.bf16.msra.mxu0 0
        %2160 = vmatprep.subr.bf16.mxu0 0
        %2161 = vmatpush2.bf16.msra.mxu0 0
        %2162 = vmatprep.subr.bf16.mxu0 0
        %2163 = vmatpush2.bf16.msra.mxu0 0
        %2164 = vmatprep.mubr.bf16.mxu0 0
        %2165 = vmatmul.mubr.bf16.gmra.mxu0 %v2097
        %v2166 = vpop.f32.mrf.mxu0
        %v2167 = vadd.f32 0.0, %v2166
        %v2168 = vpop.f32.mrf.mxu0
        %v2169 = vpop.f32.mrf.mxu0
        %v2170 = vadd.f32 0.0, %v2169
        %v2171 = vpop.f32.mrf.mxu0
        %2172 = vmatprep.mubr.bf16.mxu0 0
        %2173 = vmatmul.mubr.bf16.gmra.mxu0 %v2100
        %v2174 = vpop.f32.mrf.mxu0
        %v2175 = vadd.f32 0.0, %v2174
        %v2176 = vpop.f32.mrf.mxu0
        %v2177 = vpop.f32.mrf.mxu0
        %v2178 = vadd.f32 0.0, %v2177
        %v2179 = vpop.f32.mrf.mxu0
        %2180 = vmatprep.mubr.bf16.mxu0 0
        %2181 = vmatmul.mubr.bf16.gmra.mxu0 %v2103
        %v2182 = vpop.f32.mrf.mxu0
        %v2183 = vadd.f32 0.0, %v2182
        %v2184 = vpop.f32.mrf.mxu0
        %v2185 = vpop.f32.mrf.mxu0
        %v2186 = vadd.f32 0.0, %v2185
        %v2187 = vpop.f32.mrf.mxu0
        %2188 = vmatprep.mubr.bf16.mxu0 0
        %2189 = vmatmul.mubr.bf16.gmra.mxu0 %v2106
        %v2190 = vpop.f32.mrf.mxu0
        %v2191 = vadd.f32 0.0, %v2190
        %v2192 = vpop.f32.mrf.mxu0
        %v2193 = vpop.f32.mrf.mxu0
        %v2194 = vadd.f32 0.0, %v2193
        %v2195 = vpop.f32.mrf.mxu0
        %2196 = vmatprep.mubr.bf16.mxu0 0
        %2197 = vmatmul.mubr.bf16.gmra.mxu0 %v2109
        %v2198 = vpop.f32.mrf.mxu0
        %v2199 = vadd.f32 0.0, %v2198
        %v2200 = vpop.f32.mrf.mxu0
        %v2201 = vpop.f32.mrf.mxu0
        %v2202 = vadd.f32 0.0, %v2201
        %v2203 = vpop.f32.mrf.mxu0
        %2204 = vmatprep.mubr.bf16.mxu0 0
        %2205 = vmatmul.mubr.bf16.gmra.mxu0 %v2112
        %v2206 = vpop.f32.mrf.mxu0
        %v2207 = vadd.f32 0.0, %v2206
        %v2208 = vpop.f32.mrf.mxu0
        %v2209 = vpop.f32.mrf.mxu0
        %v2210 = vadd.f32 0.0, %v2209
        %v2211 = vpop.f32.mrf.mxu0
        %2212 = vmatprep.mubr.bf16.mxu0 0
        %2213 = vmatmul.mubr.bf16.gmra.mxu0 %v2115
        %v2214 = vpop.f32.mrf.mxu0
        %v2215 = vadd.f32 0.0, %v2214
        %v2216 = vpop.f32.mrf.mxu0
        %v2217 = vpop.f32.mrf.mxu0
        %v2218 = vadd.f32 0.0, %v2217
        %v2219 = vpop.f32.mrf.mxu0
        %2220 = vmatprep.mubr.bf16.mxu0 0
        %2221 = vmatmul.mubr.bf16.gmra.mxu0 %v2118
        %v2222 = vpop.f32.mrf.mxu0
        %v2223 = vadd.f32 0.0, %v2222
        %v2224 = vpop.f32.mrf.mxu0
        %v2225 = vpop.f32.mrf.mxu0
        %v2226 = vadd.f32 0.0, %v2225
        %v2227 = vpop.f32.mrf.mxu0
        %2228 = vmatprep.mubr.bf16.mxu0 0
        %2229 = vmatmul.mubr.bf16.gmra.mxu0 %v2121
        %v2230 = vpop.f32.mrf.mxu0
        %v2231 = vadd.f32 0.0, %v2230
        %v2232 = vpop.f32.mrf.mxu0
        %v2233 = vpop.f32.mrf.mxu0
        %v2234 = vadd.f32 0.0, %v2233
        %v2235 = vpop.f32.mrf.mxu0
        %2236 = vmatprep.mubr.bf16.mxu0 0
        %2237 = vmatmul.mubr.bf16.gmra.mxu0 %v2124
        %v2238 = vpop.f32.mrf.mxu0
        %v2239 = vadd.f32 0.0, %v2238
        %v2240 = vpop.f32.mrf.mxu0
        %v2241 = vpop.f32.mrf.mxu0
        %v2242 = vadd.f32 0.0, %v2241
        %v2243 = vpop.f32.mrf.mxu0
        %2244 = vmatprep.mubr.bf16.mxu0 0
        %2245 = vmatmul.mubr.bf16.gmra.mxu0 %v2127
        %v2246 = vpop.f32.mrf.mxu0
        %v2247 = vadd.f32 0.0, %v2246
        %v2248 = vpop.f32.mrf.mxu0
        %v2249 = vpop.f32.mrf.mxu0
        %v2250 = vpop.f32.mrf.mxu0
        %2251 = vdwg.mxu0
        %v2252 = vadd.f32 %v1959, %v2167
        %v2253 = vadd.f32 %v1960, %v2170
        %v2254 = vadd.f32 %v1961, %v2175
        %v2255 = vadd.f32 %v1962, %v2178
        %v2256 = vadd.f32 %v1963, %v2183
        %v2257 = vadd.f32 %v1964, %v2186
        %v2258 = vadd.f32 %v1965, %v2191
        %v2259 = vadd.f32 %v1966, %v2194
        %v2260 = vadd.f32 %v1967, %v2199
        %v2261 = vadd.f32 %v1968, %v2202
        %v2262 = vadd.f32 %v1969, %v2207
        %v2263 = vadd.f32 %v1970, %v2210
        %v2264 = vadd.f32 %v1971, %v2215
        %v2265 = vadd.f32 %v1972, %v2218
        %v2266 = vadd.f32 %v1973, %v2223
        %v2267 = vadd.f32 %v1974, %v2226
        %v2268 = vadd.f32 %v1975, %v2231
        %v2269 = vadd.f32 %v1976, %v2234
        %v2270 = vadd.f32 %v1977, %v2239
        %v2271 = vadd.f32 %v1978, %v2242
        %v2272 = vadd.f32 %v1979, %v2247
        %v2273 = vld [vmem:[%s195 + $0xc] sm:$0x8]
        %s2274 = scalar_lea.vmem %s1, 96
        %v2275 = vld [vmem:[%s2274] sm:$0xf]
        %v2276 = vld [vmem:[%s2274 + $0x4] sm:$0xf]
        %v2277 = vld [vmem:[%s2274 + $0x8] sm:$0xf]
        %v2279 = vunpack.c.l.b16 %v2273
        %v2280 = vpack.c.b16 %v1740, %v2279
        %v2281 = vrot.slane %v2280, 3
        %v2282 = vrot.slane %v1762, 3
        %v2283 = vsel %vm989, %v2281, %v2282
        %v2284 = vrot.slane %v1763, 3
        %v2285 = vsel %vm989, %v2282, %v2284
        %v2286 = vrot.slane %v1764, 3
        %v2287 = vsel %vm989, %v2284, %v2286
        %v2288 = vrot.slane %v1765, 3
        %v2289 = vsel %vm989, %v2286, %v2288
        %v2290 = vrot.slane %v1766, 3
        %v2291 = vsel %vm989, %v2288, %v2290
        %v2292 = vrot.slane %v1767, 3
        %v2293 = vsel %vm989, %v2290, %v2292
        %v2294 = vrot.slane %v1768, 3
        %v2295 = vsel %vm989, %v2292, %v2294
        %v2296 = vrot.slane %v1769, 3
        %v2297 = vsel %vm989, %v2294, %v2296
        %v2298 = vrot.slane %v1770, 3
        %v2299 = vsel %vm989, %v2296, %v2298
        %v2300 = vrot.slane %v1987, 3
        %v2301 = vsel %vm989, %v2298, %v2300
        %v2305 = vunpack.c.l.b16 %v2275
        %v2306 = vunpack.c.l.b16 %v2276
        %v2307 = vunpack.c.l.b16 %v2277
        %v2308 = vpack.c.b16 %v2306, %v2305
        %v2309 = vpack.c.b16 %v2307, %v2307
        %v2312 = vsel %vm378, %v2283, 0
        %v2315 = vsel %vm378, %v2285, 0
        %v2318 = vsel %vm378, %v2287, 0
        %v2321 = vsel %vm378, %v2289, 0
        %v2324 = vsel %vm378, %v2291, 0
        %v2327 = vsel %vm378, %v2293, 0
        %v2330 = vsel %vm378, %v2295, 0
        %v2333 = vsel %vm378, %v2297, 0
        %v2336 = vsel %vm378, %v2299, 0
        %v2339 = vsel %vm378, %v2301, 0
        %v2342 = vsel %vm378, %v2300, 0
        %v2345 = vsel %vm412, %v2309, 0
        %2347 = vmatprep.subr.bf16.mxu0 0
        %2348 = vmatpush1.bf16.msra.mxu0 0
        %2349 = vmatprep.subr.bf16.mxu0 0
        %2350 = vmatpush1.bf16.msra.mxu0 0
        %2351 = vmatprep.subr.bf16.mxu0 0
        %2352 = vmatpush1.bf16.msra.mxu0 0
        %2353 = vmatprep.subr.bf16.mxu0 0
        %2354 = vmatpush1.bf16.msra.mxu0 0
        %2355 = vmatprep.subr.bf16.mxu0 0
        %2356 = vmatpush1.bf16.msra.mxu0 0
        %2357 = vmatprep.subr.bf16.mxu0 0
        %2358 = vmatpush1.bf16.msra.mxu0 0
        %2359 = vmatprep.subr.bf16.mxu0 0
        %2360 = vmatpush1.bf16.msra.mxu0 %v2345
        %2361 = vmatprep.subr.bf16.mxu0 0
        %2362 = vmatpush1.bf16.msra.mxu0 %v2308
        %2363 = vmatprep.subr.bf16.mxu0 0
        %2364 = vmatpush2.bf16.msra.mxu0 0
        %2365 = vmatprep.subr.bf16.mxu0 0
        %2366 = vmatpush2.bf16.msra.mxu0 0
        %2367 = vmatprep.subr.bf16.mxu0 0
        %2368 = vmatpush2.bf16.msra.mxu0 0
        %2369 = vmatprep.subr.bf16.mxu0 0
        %2370 = vmatpush2.bf16.msra.mxu0 0
        %2371 = vmatprep.subr.bf16.mxu0 0
        %2372 = vmatpush2.bf16.msra.mxu0 0
        %2373 = vmatprep.subr.bf16.mxu0 0
        %2374 = vmatpush2.bf16.msra.mxu0 0
        %2375 = vmatprep.subr.bf16.mxu0 0
        %2376 = vmatpush2.bf16.msra.mxu0 0
        %2377 = vmatprep.subr.bf16.mxu0 0
        %2378 = vmatpush2.bf16.msra.mxu0 0
        %2379 = vmatprep.mubr.bf16.mxu0 0
        %2380 = vmatmul.mubr.bf16.gmra.mxu0 %v2312
        %v2381 = vpop.f32.mrf.mxu0
        %v2382 = vadd.f32 0.0, %v2381
        %v2383 = vpop.f32.mrf.mxu0
        %v2384 = vpop.f32.mrf.mxu0
        %v2385 = vadd.f32 0.0, %v2384
        %v2386 = vpop.f32.mrf.mxu0
        %2387 = vmatprep.mubr.bf16.mxu0 0
        %2388 = vmatmul.mubr.bf16.gmra.mxu0 %v2315
        %v2389 = vpop.f32.mrf.mxu0
        %v2390 = vadd.f32 0.0, %v2389
        %v2391 = vpop.f32.mrf.mxu0
        %v2392 = vpop.f32.mrf.mxu0
        %v2393 = vadd.f32 0.0, %v2392
        %v2394 = vpop.f32.mrf.mxu0
        %2395 = vmatprep.mubr.bf16.mxu0 0
        %2396 = vmatmul.mubr.bf16.gmra.mxu0 %v2318
        %v2397 = vpop.f32.mrf.mxu0
        %v2398 = vadd.f32 0.0, %v2397
        %v2399 = vpop.f32.mrf.mxu0
        %v2400 = vpop.f32.mrf.mxu0
        %v2401 = vadd.f32 0.0, %v2400
        %v2402 = vpop.f32.mrf.mxu0
        %2403 = vmatprep.mubr.bf16.mxu0 0
        %2404 = vmatmul.mubr.bf16.gmra.mxu0 %v2321
        %v2405 = vpop.f32.mrf.mxu0
        %v2406 = vadd.f32 0.0, %v2405
        %v2407 = vpop.f32.mrf.mxu0
        %v2408 = vpop.f32.mrf.mxu0
        %v2409 = vadd.f32 0.0, %v2408
        %v2410 = vpop.f32.mrf.mxu0
        %2411 = vmatprep.mubr.bf16.mxu0 0
        %2412 = vmatmul.mubr.bf16.gmra.mxu0 %v2324
        %v2413 = vpop.f32.mrf.mxu0
        %v2414 = vadd.f32 0.0, %v2413
        %v2415 = vpop.f32.mrf.mxu0
        %v2416 = vpop.f32.mrf.mxu0
        %v2417 = vadd.f32 0.0, %v2416
        %v2418 = vpop.f32.mrf.mxu0
        %2419 = vmatprep.mubr.bf16.mxu0 0
        %2420 = vmatmul.mubr.bf16.gmra.mxu0 %v2327
        %v2421 = vpop.f32.mrf.mxu0
        %v2422 = vadd.f32 0.0, %v2421
        %v2423 = vpop.f32.mrf.mxu0
        %v2424 = vpop.f32.mrf.mxu0
        %v2425 = vadd.f32 0.0, %v2424
        %v2426 = vpop.f32.mrf.mxu0
        %2427 = vmatprep.mubr.bf16.mxu0 0
        %2428 = vmatmul.mubr.bf16.gmra.mxu0 %v2330
        %v2429 = vpop.f32.mrf.mxu0
        %v2430 = vadd.f32 0.0, %v2429
        %v2431 = vpop.f32.mrf.mxu0
        %v2432 = vpop.f32.mrf.mxu0
        %v2433 = vadd.f32 0.0, %v2432
        %v2434 = vpop.f32.mrf.mxu0
        %2435 = vmatprep.mubr.bf16.mxu0 0
        %2436 = vmatmul.mubr.bf16.gmra.mxu0 %v2333
        %v2437 = vpop.f32.mrf.mxu0
        %v2438 = vadd.f32 0.0, %v2437
        %v2439 = vpop.f32.mrf.mxu0
        %v2440 = vpop.f32.mrf.mxu0
        %v2441 = vadd.f32 0.0, %v2440
        %v2442 = vpop.f32.mrf.mxu0
        %2443 = vmatprep.mubr.bf16.mxu0 0
        %2444 = vmatmul.mubr.bf16.gmra.mxu0 %v2336
        %v2445 = vpop.f32.mrf.mxu0
        %v2446 = vadd.f32 0.0, %v2445
        %v2447 = vpop.f32.mrf.mxu0
        %v2448 = vpop.f32.mrf.mxu0
        %v2449 = vadd.f32 0.0, %v2448
        %v2450 = vpop.f32.mrf.mxu0
        %2451 = vmatprep.mubr.bf16.mxu0 0
        %2452 = vmatmul.mubr.bf16.gmra.mxu0 %v2339
        %v2453 = vpop.f32.mrf.mxu0
        %v2454 = vadd.f32 0.0, %v2453
        %v2455 = vpop.f32.mrf.mxu0
        %v2456 = vpop.f32.mrf.mxu0
        %v2457 = vadd.f32 0.0, %v2456
        %v2458 = vpop.f32.mrf.mxu0
        %2459 = vmatprep.mubr.bf16.mxu0 0
        %2460 = vmatmul.mubr.bf16.gmra.mxu0 %v2342
        %v2461 = vpop.f32.mrf.mxu0
        %v2462 = vadd.f32 0.0, %v2461
        %v2463 = vpop.f32.mrf.mxu0
        %v2464 = vpop.f32.mrf.mxu0
        %v2465 = vpop.f32.mrf.mxu0
        %2466 = vdwg.mxu0
        %v2467 = vadd.f32 %v2252, %v2382
        %v2468 = vadd.f32 %v2253, %v2385
        %v2469 = vadd.f32 %v2254, %v2390
        %v2470 = vadd.f32 %v2255, %v2393
        %v2471 = vadd.f32 %v2256, %v2398
        %v2472 = vadd.f32 %v2257, %v2401
        %v2473 = vadd.f32 %v2258, %v2406
        %v2474 = vadd.f32 %v2259, %v2409
        %v2475 = vadd.f32 %v2260, %v2414
        %v2476 = vadd.f32 %v2261, %v2417
        %v2477 = vadd.f32 %v2262, %v2422
        %v2478 = vadd.f32 %v2263, %v2425
        %v2479 = vadd.f32 %v2264, %v2430
        %v2480 = vadd.f32 %v2265, %v2433
        %v2481 = vadd.f32 %v2266, %v2438
        %v2482 = vadd.f32 %v2267, %v2441
        %v2483 = vadd.f32 %v2268, %v2446
        %v2484 = vadd.f32 %v2269, %v2449
        %v2485 = vadd.f32 %v2270, %v2454
        %v2486 = vadd.f32 %v2271, %v2457
        %v2487 = vadd.f32 %v2272, %v2462
        %v2488 = vld [vmem:[%s2] sm:$0x1]
        %v2490 = vlaneseq
        %v2491 = vshrl.u32 %v2490, 7
        %v2492 = vsub.s32 0, %v2491
        %v2493 = vrot.slane %v2488, %v2492
        %v2495 = vmul.f32 %v2467, %v2493
        %v2496 = vmul.f32 %v2468, %v2493
        %v2497 = vmul.f32 %v2469, %v2493
        %v2498 = vmul.f32 %v2470, %v2493
        %v2499 = vmul.f32 %v2471, %v2493
        %v2500 = vmul.f32 %v2472, %v2493
        %v2501 = vmul.f32 %v2473, %v2493
        %v2502 = vmul.f32 %v2474, %v2493
        %v2503 = vmul.f32 %v2475, %v2493
        %v2504 = vmul.f32 %v2476, %v2493
        %v2505 = vmul.f32 %v2477, %v2493
        %v2506 = vmul.f32 %v2478, %v2493
        %v2507 = vmul.f32 %v2479, %v2493
        %v2508 = vmul.f32 %v2480, %v2493
        %v2509 = vmul.f32 %v2481, %v2493
        %v2510 = vmul.f32 %v2482, %v2493
        %v2511 = vmul.f32 %v2483, %v2493
        %v2512 = vmul.f32 %v2484, %v2493
        %v2513 = vmul.f32 %v2485, %v2493
        %v2514 = vmul.f32 %v2486, %v2493
        %v2515 = vmul.f32 %v2487, %v2493
        %v2516 = vld [vmem:[%s3] sm:$0x1]
        %v2518 = vlaneseq
        %v2519 = vshrl.u32 %v2518, 7
        %v2520 = vsub.s32 0, %v2519
        %v2521 = vrot.slane %v2516, %v2520
        %v2523 = vadd.f32 %v2495, %v2521
        %v2524 = vadd.f32 %v2496, %v2521
        %v2525 = vadd.f32 %v2497, %v2521
        %v2526 = vadd.f32 %v2498, %v2521
        %v2527 = vadd.f32 %v2499, %v2521
        %v2528 = vadd.f32 %v2500, %v2521
        %v2529 = vadd.f32 %v2501, %v2521
        %v2530 = vadd.f32 %v2502, %v2521
        %v2531 = vadd.f32 %v2503, %v2521
        %v2532 = vadd.f32 %v2504, %v2521
        %v2533 = vadd.f32 %v2505, %v2521
        %v2534 = vadd.f32 %v2506, %v2521
        %v2535 = vadd.f32 %v2507, %v2521
        %v2536 = vadd.f32 %v2508, %v2521
        %v2537 = vadd.f32 %v2509, %v2521
        %v2538 = vadd.f32 %v2510, %v2521
        %v2539 = vadd.f32 %v2511, %v2521
        %v2540 = vadd.f32 %v2512, %v2521
        %v2541 = vadd.f32 %v2513, %v2521
        %v2542 = vadd.f32 %v2514, %v2521
        %v2543 = vadd.f32 %v2515, %v2521
        %v2544 = vmax.f32 %v2523, 0.0
        %v2545 = vmax.f32 %v2524, 0.0
        %v2546 = vmax.f32 %v2525, 0.0
        %v2547 = vmax.f32 %v2526, 0.0
        %v2548 = vmax.f32 %v2527, 0.0
        %v2549 = vmax.f32 %v2528, 0.0
        %v2550 = vmax.f32 %v2529, 0.0
        %v2551 = vmax.f32 %v2530, 0.0
        %v2552 = vmax.f32 %v2531, 0.0
        %v2553 = vmax.f32 %v2532, 0.0
        %v2554 = vmax.f32 %v2533, 0.0
        %v2555 = vmax.f32 %v2534, 0.0
        %v2556 = vmax.f32 %v2535, 0.0
        %v2557 = vmax.f32 %v2536, 0.0
        %v2558 = vmax.f32 %v2537, 0.0
        %v2559 = vmax.f32 %v2538, 0.0
        %v2560 = vmax.f32 %v2539, 0.0
        %v2561 = vmax.f32 %v2540, 0.0
        %v2562 = vmax.f32 %v2541, 0.0
        %v2563 = vmax.f32 %v2542, 0.0
        %v2564 = vmax.f32 %v2543, 0.0
        %2565 = vst [vmem:[%s190] sm:$0xff] %v2544
        %2566 = vst [vmem:[%s190 + $0x8] sm:$0xff] %v2545
        %2567 = vst [vmem:[%s190 + $0x10] sm:$0xff] %v2546
        %2568 = vst [vmem:[%s190 + $0x18] sm:$0xff] %v2547
        %2569 = vst [vmem:[%s190 + $0x20] sm:$0xff] %v2548
        %2570 = vst [vmem:[%s190 + $0x28] sm:$0xff] %v2549
        %2571 = vst [vmem:[%s190 + $0x30] sm:$0xff] %v2550
        %2572 = vst [vmem:[%s190 + $0x38] sm:$0xff] %v2551
        %2573 = vst [vmem:[%s190 + $0x40] sm:$0xff] %v2552
        %2574 = vst [vmem:[%s190 + $0x48] sm:$0xff] %v2553
        %2575 = vst [vmem:[%s190 + $0x50] sm:$0xff] %v2554
        %2576 = vst [vmem:[%s190 + $0x58] sm:$0xff] %v2555
        %2577 = vst [vmem:[%s190 + $0x60] sm:$0xff] %v2556
        %2578 = vst [vmem:[%s190 + $0x68] sm:$0xff] %v2557
        %2579 = vst [vmem:[%s190 + $0x70] sm:$0xff] %v2558
        %2580 = vst [vmem:[%s190 + $0x78] sm:$0xff] %v2559
        %2581 = vst [vmem:[%s190 + $0x80] sm:$0xff] %v2560
        %2582 = vst [vmem:[%s190 + $0x88] sm:$0xff] %v2561
        %2583 = vst [vmem:[%s190 + $0x90] sm:$0xff] %v2562
        %2584 = vst [vmem:[%s190 + $0x98] sm:$0xff] %v2563
        %2585 = vst [vmem:[%s190 + $0xa0] sm:$0xff] %v2564
        %s2586 = sand.u32 %s115, 1
        %s2587 = scalar_lea.sflag [#allocation3], %s2586
        %s2588 = sand.u32 %s115, 1
        %s2589 = smul.addr %s2588, 168
        %s2590 = scalar_lea.vmem [#allocation2], %s2589
        // Predicated region
        $region37: #{tpu_custom_call.1} parent=35 // pred_check
          %p2591 = pneg %p125
        $region38: #{tpu_custom_call.1} parent=35 // pred_check_branch
          %2593 = sbr.rel (%p2591) target = $region40
        $region39: #{tpu_custom_call.1} parent=35 // pred_region
          %s2595 = ssub.s32 2688, 2688
          %2596 = vsyncadd %s2587, %s2595
          %s2597 = smul.addr %s18, 21
          %s2598 = smul.addr %s2597, 128
          %s2599 = scalar_lea.hbm %s4, %s2598
          %s2600 = sshll.u32 %s2590, 4
          %s2601 = int_to_ptr.vmem [resolvable:$true] %s2600
          %2606 = dma.vmem_to_hbm [thread:$0]  %s2601, 2688, %s2599, %s2587, 128, 128, 8
        $region40: #{tpu_custom_call.1} parent=35 // pred_fallthru
          _
      $region36: #{tpu_custom_call.1} parent=5 // pred_fallthru
        _
      %p2607 = scmp.le.s32.totalorder 2, %s13
      // Predicated region
      $region41: #{tpu_custom_call.1} parent=5 // pred_check
        %p2608 = pneg %p2607
      $region42: #{tpu_custom_call.1} parent=5 // pred_check_branch
        %2610 = sbr.rel (%p2608) target = $region44
      $region43: #{tpu_custom_call.1} parent=5 // pred_region
        %s2611 = ssub.s32 %s13, 2
        // Predicated region
        $region45: #{tpu_custom_call.1} parent=43 // pred_check
          %p2612 = pneg %p131
        $region46: #{tpu_custom_call.1} parent=43 // pred_check_branch
          %2614 = sbr.rel (%p2612) target = $region48
        $region47: #{tpu_custom_call.1} parent=43 // pred_region
          %s2615 = sand.u32 %s116, 1
          %s2616 = scalar_lea.sflag [#allocation3], %s2615
          %s2617 = sand.u32 %s116, 1
          %s2618 = smul.addr %s2617, 168
          %s2619 = scalar_lea.vmem [#allocation2], %s2618
          %2620 = dma.done %s2616, 2688
        $region48: #{tpu_custom_call.1} parent=43 // pred_fallthru
          _
      $region44: #{tpu_custom_call.1} parent=5 // pred_fallthru
        _
    $region6: #{tpu_custom_call.1} parent=1 // loop_footer
      %s17 = sadd.s32 1, %s13
    $region7: #{tpu_custom_call.1} parent=1 // loop_footer_branch
      %12 = sbr.rel target = $region3
    $region8: #{tpu_custom_call.1} parent=1 // loop_exit
      _
    %2621 = vsyncpa [#allocation3], 1
    %s2622 = scalar_lea.sflag [#allocation3], 1
    %2623 = vsyncpa %s2622, 1

</llo_original>
